<compile_context>
chip_gen: v6e
topology: v6e:2x2x1
jax: 0.10.0
libtpu: 0.0.40
codegen_flags: <defaults>
</compile_context>

<pallas_src>
import functools

import jax
import jax.numpy as jnp
from jax.experimental import pallas as pl
from jax.experimental.pallas import tpu as pltpu

KSIZE = 7
PAD = 3  # padding = 3 for kernel_size = 7


# ---------------------------------------------------------------------------
# Fused kernel: channel sum/max reduction + 7x7 conv + sigmoid epilogue.
# ---------------------------------------------------------------------------
def _spatial_attention_kernel(w_ref, m_ref, x_ref, o_ref, fsum_ref, fmax_ref, *,
                              C, c_chunk, H, W, halo, strip_rows, needs_mask):
    # w_ref    : SMEM (98,)   conv taps; [0:49] avg channel (pre-scaled by 1/C),
    #                         [49:98] max channel
    # m_ref    : VMEM (7, strip_rows*W) 0/1 column-validity masks per kj shift
    # x_ref    : VMEM (NB, c_chunk, HW) one channel chunk of NB batch elements
    # o_ref    : VMEM (NB, 1, HW)       sigmoid(conv) output (written in epilogue)
    # fsum_ref : VMEM (NB, halo+HW+halo) f32 running channel sum, flat row-padded
    # fmax_ref : VMEM (NB, halo+HW+halo) f32 running channel max, flat row-padded
    c = pl.program_id(1)
    HW = H * W
    NB = x_ref.shape[0]
    lo, hi = halo, halo + HW

    x = x_ref[...].astype(jnp.float32)
    if needs_mask:
        # Last channel chunk may run past C: mask invalid channels.
        ch = jax.lax.broadcasted_iota(jnp.int32, x.shape, 1) + c * c_chunk
        valid = ch < C
        psum = jnp.sum(jnp.where(valid, x, 0.0), axis=1)          # (NB, HW)
        pmax = jnp.max(jnp.where(valid, x, -jnp.inf), axis=1)     # (NB, HW)
    else:
        psum = jnp.sum(x, axis=1)
        pmax = jnp.max(x, axis=1)

    @pl.when(c == 0)
    def _():
        # Zero the (lane-aligned) row halos once per batch block; write the
        # interior with the first partials (avoids a -inf init for the max).
        zero = jnp.zeros((NB, halo), jnp.float32)
        fsum_ref[:, :lo] = zero
        fsum_ref[:, hi:] = zero
        fmax_ref[:, :lo] = zero
        fmax_ref[:, hi:] = zero
        fsum_ref[:, lo:hi] = psum
        fmax_ref[:, lo:hi] = pmax

    @pl.when(c > 0)
    def _():
        fsum_ref[:, lo:hi] = fsum_ref[:, lo:hi] + psum
        fmax_ref[:, lo:hi] = jnp.maximum(fmax_ref[:, lo:hi], pmax)

    @pl.when(c == pl.num_programs(1) - 1)
    def _():
        # Epilogue: 7x7 conv over the [avg, max] planes + sigmoid.
        # Flat formulation: output flat index q = i*W + j reads the row-padded
        # flat plane at q + halo + (ki-3)*W + (kj-3); width wrap-around taps are
        # zeroed by the per-kj column mask.
        w = [w_ref[i] for i in range(2 * KSIZE * KSIZE)]          # hoisted SMEM reads
        col_mask = [None if kj == PAD else m_ref[kj:kj + 1, :]
                    for kj in range(KSIZE)]                        # hoisted mask loads
        sl = strip_rows * W
        for s in range(H // strip_rows):                          # row-strip tiling
            qbase = s * sl
            acc = jnp.zeros((NB, sl), jnp.float32)
            for kj in range(KSIZE):
                pa = jnp.zeros((NB, sl), jnp.float32)              # avg-channel chain
                pm = jnp.zeros((NB, sl), jnp.float32)              # max-channel chain
                for ki in range(KSIZE):
                    off = halo + qbase + (ki - PAD) * W + (kj - PAD)
                    pa = pa + w[ki * KSIZE + kj] * fsum_ref[:, off:off + sl]
                    pm = pm + w[KSIZE * KSIZE + ki * KSIZE + kj] * fmax_ref[:, off:off + sl]
                contrib = pa + pm
                if col_mask[kj] is not None:
                    contrib = contrib * col_mask[kj]
                acc = acc + contrib
            o_ref[:, 0, qbase:qbase + sl] = jax.nn.sigmoid(acc).astype(o_ref.dtype)


# ---------------------------------------------------------------------------
# Tiling heuristics.
# ---------------------------------------------------------------------------
def _vmem_budget():
    """(target block bytes, scoped VMEM limit) tuned from the chip's VMEM size."""
    cap = 64 << 20                      # conservative default (v7x per-core VMEM)
    try:
        cap = int(pltpu.get_tpu_info().vmem_capacity_bytes)
    except Exception:
        pass
    limit = min((cap * 3) // 4, 96 << 20)   # v7x -> 48 MiB, v5e/v6e -> 96 MiB
    target = min(limit // 8, 8 << 20)       # v7x -> 6 MiB blocks, v5e/v6e -> 8 MiB
    return target, limit


def _choose_tiling(N, C, HW, itemsize, target_bytes):
    """Pick (batch elements per step, channel chunk) for the streaming reduction."""
    sub = 8 * max(1, 4 // itemsize)     # sublane multiple for this dtype
    per_batch = C * HW * itemsize
    if per_batch > target_bytes:
        # Split channels: largest sublane-aligned chunk under the byte target.
        nb = 1
        cc = (target_bytes // (HW * itemsize)) // sub * sub
        c_chunk = int(min(C, max(sub, cc)))
    else:
        c_chunk = C
        nb = int(min(N, max(1, target_bytes // per_batch)))
        # vreg-pressure guard for the (NB, HW) partial sums / conv epilogue.
        while nb > 1 and nb * HW > 8192:
            nb -= 1
        if N >= 2:                      # keep >= 2 batch blocks (v7x megacore)
            nb = min(nb, max(1, N // 2))
        while N % nb:
            nb -= 1
    return nb, c_chunk


def _pick_strip_rows(H, W, nb, budget_elems=8192):
    """Rows per conv strip so NB*strip*W stays comfortably inside the vreg file."""
    if nb * H * W <= budget_elems:
        return H
    best = 1
    for s in range(1, H):
        if H % s == 0 and nb * s * W <= budget_elems:
            best = s
    return best


# ---------------------------------------------------------------------------
# Wrapper.
# ---------------------------------------------------------------------------
def spatial_attention(x, weight, *, c_chunk=None, nb=None):
    """x: (N, C, H, W); weight: (1, 2, 7, 7) (PyTorch Conv2d weight layout)."""
    N, C, H, W = x.shape
    HW = H * W
    itemsize = jnp.dtype(x.dtype).itemsize
    target_bytes, vmem_limit = _vmem_budget()

    nb_def, cc_def = _choose_tiling(N, C, HW, itemsize, target_bytes)
    if c_chunk is None:
        c_chunk = cc_def
    if nb is None:
        nb = nb_def
    assert N % nb == 0, "batch block must divide N"
    n_chunks = -(-C // c_chunk)              # cdiv: masked last chunk if needed
    needs_mask = (C % c_chunk) != 0

    halo = -(-(3 * W + 3) // 128) * 128      # 128-aligned flat row/col halo
    flat_len = 2 * halo + HW
    strip_rows = _pick_strip_rows(H, W, nb)

    # 0/1 column-validity masks for the 7 lane (kj) shifts, tiled over one strip.
    jj = jnp.arange(W, dtype=jnp.int32)
    col_masks = jnp.stack(
        [((jj >= PAD - kj) & (jj < W + PAD - kj)).astype(jnp.float32)
         for kj in range(KSIZE)])                          # (7, W)
    masks = jnp.tile(col_masks, (1, strip_rows))           # (7, strip_rows*W)

    # Flat conv taps: [0:49] avg channel (pre-scaled by 1/C so the kernel only
    # keeps a plain channel SUM), [49:98] max channel.
    w32 = weight.astype(jnp.float32)
    w_flat = jnp.concatenate([w32[0, 0].reshape(-1) * jnp.float32(1.0 / C),
                              w32[0, 1].reshape(-1)])

    kernel = functools.partial(
        _spatial_attention_kernel, C=C, c_chunk=c_chunk, H=H, W=W,
        halo=halo, strip_rows=strip_rows, needs_mask=needs_mask)

    out_flat = pl.pallas_call(
        kernel,
        out_shape=jax.ShapeDtypeStruct((N, 1, HW), x.dtype),
        grid=(N // nb, n_chunks),
        in_specs=[
            pl.BlockSpec(memory_space=pltpu.SMEM),                        # conv taps
            pl.BlockSpec((KSIZE, strip_rows * W), lambda n, c: (0, 0)),   # col masks
            pl.BlockSpec((nb, c_chunk, HW), lambda n, c: (n, c, 0)),      # x chunk
        ],
        out_specs=pl.BlockSpec((nb, 1, HW), lambda n, c: (n, 0, 0)),
        scratch_shapes=[
            pltpu.VMEM((nb, flat_len), jnp.float32),   # running channel sum (flat)
            pltpu.VMEM((nb, flat_len), jnp.float32),   # running channel max (flat)
        ],
        compiler_params=pltpu.CompilerParams(
            dimension_semantics=("parallel", "arbitrary"),
            vmem_limit_bytes=int(vmem_limit)),
    )(w_flat, masks, x.reshape(N, C, HW))

    return out_flat.reshape(N, 1, H, W)


def spatial_attention_ref(x, weight):
    """Pure-JAX reference (mirrors the PyTorch forward) for verification."""
    avg_out = jnp.mean(x, axis=1, keepdims=True)
    max_out = jnp.max(x, axis=1, keepdims=True)
    cat = jnp.concatenate([avg_out, max_out], axis=1)
    y = jax.lax.conv_general_dilated(
        cat, weight, window_strides=(1, 1),
        padding=((PAD, PAD), (PAD, PAD)),
        dimension_numbers=("NCHW", "OIHW", "NCHW"))
    return jax.nn.sigmoid(y)


if __name__ == "__main__":
    key = jax.random.PRNGKey(0)
    kx1, kx2, kx3, kw = jax.random.split(key, 4)
    weight = 0.1 * jax.random.normal(kw, (1, 2, KSIZE, KSIZE), dtype=jnp.float32)

    # Case 1: module-default small shape (single channel chunk).
    x1 = jax.random.normal(kx1, (2, 4, 16, 16), dtype=jnp.float32)
    out1 = jax.block_until_ready(spatial_attention(x1, weight))
    ref1 = spatial_attention_ref(x1, weight)
    assert out1.shape == (2, 1, 16, 16)
    assert jnp.allclose(out1, ref1, atol=2e-5, rtol=2e-5), "mismatch vs reference (case 1)"

    # Case 2: multi-chunk channel reduction with a masked (non-divisible) last chunk.
    x2 = jax.random.normal(kx2, (2, 20, 16, 16), dtype=jnp.float32)
    out2 = jax.block_until_ready(spatial_attention(x2, weight, c_chunk=8, nb=1))
    ref2 = spatial_attention_ref(x2, weight)
    assert out2.shape == (2, 1, 16, 16)
    assert jnp.allclose(out2, ref2, atol=2e-5, rtol=2e-5), "mismatch vs reference (case 2)"

    # Case 3: several batch elements per grid step (picked automatically).
    x3 = jax.random.normal(kx3, (4, 4, 16, 16), dtype=jnp.float32)
    out3 = jax.block_until_ready(spatial_attention(x3, weight))
    ref3 = spatial_attention_ref(x3, weight)
    assert out3.shape == (4, 1, 16, 16)
    assert jnp.allclose(out3, ref3, atol=2e-5, rtol=2e-5), "mismatch vs reference (case 3)"

    print("KERNEL_OK")
</pallas_src>

<mosaic_0001>
module attributes {stable_mosaic.version = 11 : i64} {
  func.func @_spatial_attention_kernel(%arg0: i32, %arg1: i32, %arg2: memref<98xf32, #tpu.memory_space<smem>>, %arg3: memref<7x256xf32, #tpu.memory_space<vmem>>, %arg4: memref<1x4x256xf32, #tpu.memory_space<vmem>>, %arg5: memref<1x1x256xf32, #tpu.memory_space<vmem>>, %arg6: memref<1x512xf32, #tpu.memory_space<vmem>>, %arg7: memref<1x512xf32, #tpu.memory_space<vmem>>) attributes {dimension_semantics = [#tpu.dimension_semantics<parallel>, #tpu.dimension_semantics<arbitrary>], iteration_bounds = array<i64: 2, 1>, scalar_prefetch = 0 : i64, scratch_operands = 2 : i64, tpu.core_type = #tpu.core_type<tc>, window_params = [{transform_indices = @transform_0, window_bounds = array<i64: 98>}, {pipeline_mode = #tpu.pipeline_mode<synchronous>, transform_indices = @transform_1, window_bounds = array<i64: 7, 256>}, {transform_indices = @transform_2, window_bounds = array<i64: 1, 4, 256>}, {transform_indices = @transform_3, window_bounds = array<i64: 1, 1, 256>}]} {
    %c0 = arith.constant 0 : index
    %c0_0 = arith.constant 0 : index
    %c0_1 = arith.constant 0 : index
    %0 = vector.load %arg4[%c0, %c0_0, %c0_1] : memref<1x4x256xf32, #tpu.memory_space<vmem>>, vector<1x4x256xf32>
    %cst = arith.constant dense<0.000000e+00> : vector<1x256xf32>
    %1 = vector.multi_reduction <add>, %0, %cst [1] : vector<1x4x256xf32> to vector<1x256xf32>
    %cst_2 = arith.constant dense<0xFF800000> : vector<1x256xf32>
    %2 = vector.multi_reduction <maximumf>, %0, %cst_2 [1] : vector<1x4x256xf32> to vector<1x256xf32>
    %c0_i32 = arith.constant 0 : i32
    %3 = arith.cmpi eq, %arg1, %c0_i32 : i32
    %4 = arith.extui %3 : i1 to i32
    %c0_i32_3 = arith.constant 0 : i32
    %5 = arith.cmpi ne, %4, %c0_i32_3 : i32
    scf.if %5 {
      %cst_8 = arith.constant 0.000000e+00 : f32
      %12 = vector.broadcast %cst_8 : f32 to vector<1x128xf32>
      %c0_9 = arith.constant 0 : index
      %c0_10 = arith.constant 0 : index
      %13 = vector.load %arg6[%c0_9, %c0_10] : memref<1x512xf32, #tpu.memory_space<vmem>>, vector<1x128xf32>
      tpu.vector_store %arg6[%c0_9, %c0_10], %12 {strides = array<i32>} : memref<1x512xf32, #tpu.memory_space<vmem>>, vector<1x128xf32>,
      %c0_11 = arith.constant 0 : index
      %c384 = arith.constant 384 : index
      %14 = vector.load %arg6[%c0_11, %c384] : memref<1x512xf32, #tpu.memory_space<vmem>>, vector<1x128xf32>
      tpu.vector_store %arg6[%c0_11, %c384], %12 {strides = array<i32>} : memref<1x512xf32, #tpu.memory_space<vmem>>, vector<1x128xf32>,
      %c0_12 = arith.constant 0 : index
      %c0_13 = arith.constant 0 : index
      %15 = vector.load %arg7[%c0_12, %c0_13] : memref<1x512xf32, #tpu.memory_space<vmem>>, vector<1x128xf32>
      tpu.vector_store %arg7[%c0_12, %c0_13], %12 {strides = array<i32>} : memref<1x512xf32, #tpu.memory_space<vmem>>, vector<1x128xf32>,
      %c0_14 = arith.constant 0 : index
      %c384_15 = arith.constant 384 : index
      %16 = vector.load %arg7[%c0_14, %c384_15] : memref<1x512xf32, #tpu.memory_space<vmem>>, vector<1x128xf32>
      tpu.vector_store %arg7[%c0_14, %c384_15], %12 {strides = array<i32>} : memref<1x512xf32, #tpu.memory_space<vmem>>, vector<1x128xf32>,
      %c0_16 = arith.constant 0 : index
      %c128 = arith.constant 128 : index
      %17 = vector.load %arg6[%c0_16, %c128] : memref<1x512xf32, #tpu.memory_space<vmem>>, vector<1x256xf32>
      tpu.vector_store %arg6[%c0_16, %c128], %1 {strides = array<i32>} : memref<1x512xf32, #tpu.memory_space<vmem>>, vector<1x256xf32>,
      %c0_17 = arith.constant 0 : index
      %c128_18 = arith.constant 128 : index
      %18 = vector.load %arg7[%c0_17, %c128_18] : memref<1x512xf32, #tpu.memory_space<vmem>>, vector<1x256xf32>
      tpu.vector_store %arg7[%c0_17, %c128_18], %2 {strides = array<i32>} : memref<1x512xf32, #tpu.memory_space<vmem>>, vector<1x256xf32>,
    } else {
    }
    %c0_i32_4 = arith.constant 0 : i32
    %6 = arith.cmpi sgt, %arg1, %c0_i32_4 : i32
    %7 = arith.extui %6 : i1 to i32
    %c0_i32_5 = arith.constant 0 : i32
    %8 = arith.cmpi ne, %7, %c0_i32_5 : i32
    scf.if %8 {
      %c0_8 = arith.constant 0 : index
      %c128 = arith.constant 128 : index
      %12 = vector.load %arg6[%c0_8, %c128] : memref<1x512xf32, #tpu.memory_space<vmem>>, vector<1x256xf32>
      %13 = arith.addf %12, %1 : vector<1x256xf32>
      %c0_9 = arith.constant 0 : index
      %c128_10 = arith.constant 128 : index
      %14 = vector.load %arg6[%c0_9, %c128_10] : memref<1x512xf32, #tpu.memory_space<vmem>>, vector<1x256xf32>
      tpu.vector_store %arg6[%c0_9, %c128_10], %13 {strides = array<i32>} : memref<1x512xf32, #tpu.memory_space<vmem>>, vector<1x256xf32>,
      %c0_11 = arith.constant 0 : index
      %c128_12 = arith.constant 128 : index
      %15 = vector.load %arg7[%c0_11, %c128_12] : memref<1x512xf32, #tpu.memory_space<vmem>>, vector<1x256xf32>
      %16 = arith.maximumf %15, %2 : vector<1x256xf32>
      %c0_13 = arith.constant 0 : index
      %c128_14 = arith.constant 128 : index
      %17 = vector.load %arg7[%c0_13, %c128_14] : memref<1x512xf32, #tpu.memory_space<vmem>>, vector<1x256xf32>
      tpu.vector_store %arg7[%c0_13, %c128_14], %16 {strides = array<i32>} : memref<1x512xf32, #tpu.memory_space<vmem>>, vector<1x256xf32>,
    } else {
    }
    %c0_i32_6 = arith.constant 0 : i32
    %9 = arith.cmpi eq, %arg1, %c0_i32_6 : i32
    %10 = arith.extui %9 : i1 to i32
    %c0_i32_7 = arith.constant 0 : i32
    %11 = arith.cmpi ne, %10, %c0_i32_7 : i32
    scf.if %11 {
      %c0_8 = arith.constant 0 : index
      %12 = memref.load %arg2[%c0_8] : memref<98xf32, #tpu.memory_space<smem>>
      %c1 = arith.constant 1 : index
      %13 = memref.load %arg2[%c1] : memref<98xf32, #tpu.memory_space<smem>>
      %c2 = arith.constant 2 : index
      %14 = memref.load %arg2[%c2] : memref<98xf32, #tpu.memory_space<smem>>
      %c3 = arith.constant 3 : index
      %15 = memref.load %arg2[%c3] : memref<98xf32, #tpu.memory_space<smem>>
      %c4 = arith.constant 4 : index
      %16 = memref.load %arg2[%c4] : memref<98xf32, #tpu.memory_space<smem>>
      %c5 = arith.constant 5 : index
      %17 = memref.load %arg2[%c5] : memref<98xf32, #tpu.memory_space<smem>>
      %c6 = arith.constant 6 : index
      %18 = memref.load %arg2[%c6] : memref<98xf32, #tpu.memory_space<smem>>
      %c7 = arith.constant 7 : index
      %19 = memref.load %arg2[%c7] : memref<98xf32, #tpu.memory_space<smem>>
      %c8 = arith.constant 8 : index
      %20 = memref.load %arg2[%c8] : memref<98xf32, #tpu.memory_space<smem>>
      %c9 = arith.constant 9 : index
      %21 = memref.load %arg2[%c9] : memref<98xf32, #tpu.memory_space<smem>>
      %c10 = arith.constant 10 : index
      %22 = memref.load %arg2[%c10] : memref<98xf32, #tpu.memory_space<smem>>
      %c11 = arith.constant 11 : index
      %23 = memref.load %arg2[%c11] : memref<98xf32, #tpu.memory_space<smem>>
      %c12 = arith.constant 12 : index
      %24 = memref.load %arg2[%c12] : memref<98xf32, #tpu.memory_space<smem>>
      %c13 = arith.constant 13 : index
      %25 = memref.load %arg2[%c13] : memref<98xf32, #tpu.memory_space<smem>>
      %c14 = arith.constant 14 : index
      %26 = memref.load %arg2[%c14] : memref<98xf32, #tpu.memory_space<smem>>
      %c15 = arith.constant 15 : index
      %27 = memref.load %arg2[%c15] : memref<98xf32, #tpu.memory_space<smem>>
      %c16 = arith.constant 16 : index
      %28 = memref.load %arg2[%c16] : memref<98xf32, #tpu.memory_space<smem>>
      %c17 = arith.constant 17 : index
      %29 = memref.load %arg2[%c17] : memref<98xf32, #tpu.memory_space<smem>>
      %c18 = arith.constant 18 : index
      %30 = memref.load %arg2[%c18] : memref<98xf32, #tpu.memory_space<smem>>
      %c19 = arith.constant 19 : index
      %31 = memref.load %arg2[%c19] : memref<98xf32, #tpu.memory_space<smem>>
      %c20 = arith.constant 20 : index
      %32 = memref.load %arg2[%c20] : memref<98xf32, #tpu.memory_space<smem>>
      %c21 = arith.constant 21 : index
      %33 = memref.load %arg2[%c21] : memref<98xf32, #tpu.memory_space<smem>>
      %c22 = arith.constant 22 : index
      %34 = memref.load %arg2[%c22] : memref<98xf32, #tpu.memory_space<smem>>
      %c23 = arith.constant 23 : index
      %35 = memref.load %arg2[%c23] : memref<98xf32, #tpu.memory_space<smem>>
      %c24 = arith.constant 24 : index
      %36 = memref.load %arg2[%c24] : memref<98xf32, #tpu.memory_space<smem>>
      %c25 = arith.constant 25 : index
      %37 = memref.load %arg2[%c25] : memref<98xf32, #tpu.memory_space<smem>>
      %c26 = arith.constant 26 : index
      %38 = memref.load %arg2[%c26] : memref<98xf32, #tpu.memory_space<smem>>
      %c27 = arith.constant 27 : index
      %39 = memref.load %arg2[%c27] : memref<98xf32, #tpu.memory_space<smem>>
      %c28 = arith.constant 28 : index
      %40 = memref.load %arg2[%c28] : memref<98xf32, #tpu.memory_space<smem>>
      %c29 = arith.constant 29 : index
      %41 = memref.load %arg2[%c29] : memref<98xf32, #tpu.memory_space<smem>>
      %c30 = arith.constant 30 : index
      %42 = memref.load %arg2[%c30] : memref<98xf32, #tpu.memory_space<smem>>
      %c31 = arith.constant 31 : index
      %43 = memref.load %arg2[%c31] : memref<98xf32, #tpu.memory_space<smem>>
      %c32 = arith.constant 32 : index
      %44 = memref.load %arg2[%c32] : memref<98xf32, #tpu.memory_space<smem>>
      %c33 = arith.constant 33 : index
      %45 = memref.load %arg2[%c33] : memref<98xf32, #tpu.memory_space<smem>>
      %c34 = arith.constant 34 : index
      %46 = memref.load %arg2[%c34] : memref<98xf32, #tpu.memory_space<smem>>
      %c35 = arith.constant 35 : index
      %47 = memref.load %arg2[%c35] : memref<98xf32, #tpu.memory_space<smem>>
      %c36 = arith.constant 36 : index
      %48 = memref.load %arg2[%c36] : memref<98xf32, #tpu.memory_space<smem>>
      %c37 = arith.constant 37 : index
      %49 = memref.load %arg2[%c37] : memref<98xf32, #tpu.memory_space<smem>>
      %c38 = arith.constant 38 : index
      %50 = memref.load %arg2[%c38] : memref<98xf32, #tpu.memory_space<smem>>
      %c39 = arith.constant 39 : index
      %51 = memref.load %arg2[%c39] : memref<98xf32, #tpu.memory_space<smem>>
      %c40 = arith.constant 40 : index
      %52 = memref.load %arg2[%c40] : memref<98xf32, #tpu.memory_space<smem>>
      %c41 = arith.constant 41 : index
      %53 = memref.load %arg2[%c41] : memref<98xf32, #tpu.memory_space<smem>>
      %c42 = arith.constant 42 : index
      %54 = memref.load %arg2[%c42] : memref<98xf32, #tpu.memory_space<smem>>
      %c43 = arith.constant 43 : index
      %55 = memref.load %arg2[%c43] : memref<98xf32, #tpu.memory_space<smem>>
      %c44 = arith.constant 44 : index
      %56 = memref.load %arg2[%c44] : memref<98xf32, #tpu.memory_space<smem>>
      %c45 = arith.constant 45 : index
      %57 = memref.load %arg2[%c45] : memref<98xf32, #tpu.memory_space<smem>>
      %c46 = arith.constant 46 : index
      %58 = memref.load %arg2[%c46] : memref<98xf32, #tpu.memory_space<smem>>
      %c47 = arith.constant 47 : index
      %59 = memref.load %arg2[%c47] : memref<98xf32, #tpu.memory_space<smem>>
      %c48 = arith.constant 48 : index
      %60 = memref.load %arg2[%c48] : memref<98xf32, #tpu.memory_space<smem>>
      %c49 = arith.constant 49 : index
      %61 = memref.load %arg2[%c49] : memref<98xf32, #tpu.memory_space<smem>>
      %c50 = arith.constant 50 : index
      %62 = memref.load %arg2[%c50] : memref<98xf32, #tpu.memory_space<smem>>
      %c51 = arith.constant 51 : index
      %63 = memref.load %arg2[%c51] : memref<98xf32, #tpu.memory_space<smem>>
      %c52 = arith.constant 52 : index
      %64 = memref.load %arg2[%c52] : memref<98xf32, #tpu.memory_space<smem>>
      %c53 = arith.constant 53 : index
      %65 = memref.load %arg2[%c53] : memref<98xf32, #tpu.memory_space<smem>>
      %c54 = arith.constant 54 : index
      %66 = memref.load %arg2[%c54] : memref<98xf32, #tpu.memory_space<smem>>
      %c55 = arith.constant 55 : index
      %67 = memref.load %arg2[%c55] : memref<98xf32, #tpu.memory_space<smem>>
      %c56 = arith.constant 56 : index
      %68 = memref.load %arg2[%c56] : memref<98xf32, #tpu.memory_space<smem>>
      %c57 = arith.constant 57 : index
      %69 = memref.load %arg2[%c57] : memref<98xf32, #tpu.memory_space<smem>>
      %c58 = arith.constant 58 : index
      %70 = memref.load %arg2[%c58] : memref<98xf32, #tpu.memory_space<smem>>
      %c59 = arith.constant 59 : index
      %71 = memref.load %arg2[%c59] : memref<98xf32, #tpu.memory_space<smem>>
      %c60 = arith.constant 60 : index
      %72 = memref.load %arg2[%c60] : memref<98xf32, #tpu.memory_space<smem>>
      %c61 = arith.constant 61 : index
      %73 = memref.load %arg2[%c61] : memref<98xf32, #tpu.memory_space<smem>>
      %c62 = arith.constant 62 : index
      %74 = memref.load %arg2[%c62] : memref<98xf32, #tpu.memory_space<smem>>
      %c63 = arith.constant 63 : index
      %75 = memref.load %arg2[%c63] : memref<98xf32, #tpu.memory_space<smem>>
      %c64 = arith.constant 64 : index
      %76 = memref.load %arg2[%c64] : memref<98xf32, #tpu.memory_space<smem>>
      %c65 = arith.constant 65 : index
      %77 = memref.load %arg2[%c65] : memref<98xf32, #tpu.memory_space<smem>>
      %c66 = arith.constant 66 : index
      %78 = memref.load %arg2[%c66] : memref<98xf32, #tpu.memory_space<smem>>
      %c67 = arith.constant 67 : index
      %79 = memref.load %arg2[%c67] : memref<98xf32, #tpu.memory_space<smem>>
      %c68 = arith.constant 68 : index
      %80 = memref.load %arg2[%c68] : memref<98xf32, #tpu.memory_space<smem>>
      %c69 = arith.constant 69 : index
      %81 = memref.load %arg2[%c69] : memref<98xf32, #tpu.memory_space<smem>>
      %c70 = arith.constant 70 : index
      %82 = memref.load %arg2[%c70] : memref<98xf32, #tpu.memory_space<smem>>
      %c71 = arith.constant 71 : index
      %83 = memref.load %arg2[%c71] : memref<98xf32, #tpu.memory_space<smem>>
      %c72 = arith.constant 72 : index
      %84 = memref.load %arg2[%c72] : memref<98xf32, #tpu.memory_space<smem>>
      %c73 = arith.constant 73 : index
      %85 = memref.load %arg2[%c73] : memref<98xf32, #tpu.memory_space<smem>>
      %c74 = arith.constant 74 : index
      %86 = memref.load %arg2[%c74] : memref<98xf32, #tpu.memory_space<smem>>
      %c75 = arith.constant 75 : index
      %87 = memref.load %arg2[%c75] : memref<98xf32, #tpu.memory_space<smem>>
      %c76 = arith.constant 76 : index
      %88 = memref.load %arg2[%c76] : memref<98xf32, #tpu.memory_space<smem>>
      %c77 = arith.constant 77 : index
      %89 = memref.load %arg2[%c77] : memref<98xf32, #tpu.memory_space<smem>>
      %c78 = arith.constant 78 : index
      %90 = memref.load %arg2[%c78] : memref<98xf32, #tpu.memory_space<smem>>
      %c79 = arith.constant 79 : index
      %91 = memref.load %arg2[%c79] : memref<98xf32, #tpu.memory_space<smem>>
      %c80 = arith.constant 80 : index
      %92 = memref.load %arg2[%c80] : memref<98xf32, #tpu.memory_space<smem>>
      %c81 = arith.constant 81 : index
      %93 = memref.load %arg2[%c81] : memref<98xf32, #tpu.memory_space<smem>>
      %c82 = arith.constant 82 : index
      %94 = memref.load %arg2[%c82] : memref<98xf32, #tpu.memory_space<smem>>
      %c83 = arith.constant 83 : index
      %95 = memref.load %arg2[%c83] : memref<98xf32, #tpu.memory_space<smem>>
      %c84 = arith.constant 84 : index
      %96 = memref.load %arg2[%c84] : memref<98xf32, #tpu.memory_space<smem>>
      %c85 = arith.constant 85 : index
      %97 = memref.load %arg2[%c85] : memref<98xf32, #tpu.memory_space<smem>>
      %c86 = arith.constant 86 : index
      %98 = memref.load %arg2[%c86] : memref<98xf32, #tpu.memory_space<smem>>
      %c87 = arith.constant 87 : index
      %99 = memref.load %arg2[%c87] : memref<98xf32, #tpu.memory_space<smem>>
      %c88 = arith.constant 88 : index
      %100 = memref.load %arg2[%c88] : memref<98xf32, #tpu.memory_space<smem>>
      %c89 = arith.constant 89 : index
      %101 = memref.load %arg2[%c89] : memref<98xf32, #tpu.memory_space<smem>>
      %c90 = arith.constant 90 : index
      %102 = memref.load %arg2[%c90] : memref<98xf32, #tpu.memory_space<smem>>
      %c91 = arith.constant 91 : index
      %103 = memref.load %arg2[%c91] : memref<98xf32, #tpu.memory_space<smem>>
      %c92 = arith.constant 92 : index
      %104 = memref.load %arg2[%c92] : memref<98xf32, #tpu.memory_space<smem>>
      %c93 = arith.constant 93 : index
      %105 = memref.load %arg2[%c93] : memref<98xf32, #tpu.memory_space<smem>>
      %c94 = arith.constant 94 : index
      %106 = memref.load %arg2[%c94] : memref<98xf32, #tpu.memory_space<smem>>
      %c95 = arith.constant 95 : index
      %107 = memref.load %arg2[%c95] : memref<98xf32, #tpu.memory_space<smem>>
      %c96 = arith.constant 96 : index
      %108 = memref.load %arg2[%c96] : memref<98xf32, #tpu.memory_space<smem>>
      %c97 = arith.constant 97 : index
      %109 = memref.load %arg2[%c97] : memref<98xf32, #tpu.memory_space<smem>>
      %c0_9 = arith.constant 0 : index
      %c0_10 = arith.constant 0 : index
      %110 = vector.load %arg3[%c0_9, %c0_10] : memref<7x256xf32, #tpu.memory_space<vmem>>, vector<1x256xf32>
      %c1_11 = arith.constant 1 : index
      %c0_12 = arith.constant 0 : index
      %111 = vector.load %arg3[%c1_11, %c0_12] : memref<7x256xf32, #tpu.memory_space<vmem>>, vector<1x256xf32>
      %c2_13 = arith.constant 2 : index
      %c0_14 = arith.constant 0 : index
      %112 = vector.load %arg3[%c2_13, %c0_14] : memref<7x256xf32, #tpu.memory_space<vmem>>, vector<1x256xf32>
      %c4_15 = arith.constant 4 : index
      %c0_16 = arith.constant 0 : index
      %113 = vector.load %arg3[%c4_15, %c0_16] : memref<7x256xf32, #tpu.memory_space<vmem>>, vector<1x256xf32>
      %c5_17 = arith.constant 5 : index
      %c0_18 = arith.constant 0 : index
      %114 = vector.load %arg3[%c5_17, %c0_18] : memref<7x256xf32, #tpu.memory_space<vmem>>, vector<1x256xf32>
      %c6_19 = arith.constant 6 : index
      %c0_20 = arith.constant 0 : index
      %115 = vector.load %arg3[%c6_19, %c0_20] : memref<7x256xf32, #tpu.memory_space<vmem>>, vector<1x256xf32>
      %cst_21 = arith.constant 0.000000e+00 : f32
      %116 = vector.broadcast %cst_21 : f32 to vector<1x256xf32>
      %cst_22 = arith.constant 0.000000e+00 : f32
      %117 = vector.broadcast %cst_22 : f32 to vector<1x256xf32>
      %cst_23 = arith.constant 0.000000e+00 : f32
      %118 = vector.broadcast %cst_23 : f32 to vector<1x256xf32>
      %c0_24 = arith.constant 0 : index
      %c77_25 = arith.constant 77 : index
      %119 = vector.load %arg6[%c0_24, %c77_25] : memref<1x512xf32, #tpu.memory_space<vmem>>, vector<1x256xf32>
      %120 = vector.broadcast %12 : f32 to vector<1x256xf32>
      %121 = arith.mulf %120, %119 : vector<1x256xf32>
      %122 = arith.addf %117, %121 : vector<1x256xf32>
      %c0_26 = arith.constant 0 : index
      %c77_27 = arith.constant 77 : index
      %123 = vector.load %arg7[%c0_26, %c77_27] : memref<1x512xf32, #tpu.memory_space<vmem>>, vector<1x256xf32>
      %124 = vector.broadcast %61 : f32 to vector<1x256xf32>
      %125 = arith.mulf %124, %123 : vector<1x256xf32>
      %126 = arith.addf %118, %125 : vector<1x256xf32>
      %c0_28 = arith.constant 0 : index
      %c93_29 = arith.constant 93 : index
      %127 = vector.load %arg6[%c0_28, %c93_29] : memref<1x512xf32, #tpu.memory_space<vmem>>, vector<1x256xf32>
      %128 = vector.broadcast %19 : f32 to vector<1x256xf32>
      %129 = arith.mulf %128, %127 : vector<1x256xf32>
      %130 = arith.addf %122, %129 : vector<1x256xf32>
      %c0_30 = arith.constant 0 : index
      %c93_31 = arith.constant 93 : index
      %131 = vector.load %arg7[%c0_30, %c93_31] : memref<1x512xf32, #tpu.memory_space<vmem>>, vector<1x256xf32>
      %132 = vector.broadcast %68 : f32 to vector<1x256xf32>
      %133 = arith.mulf %132, %131 : vector<1x256xf32>
      %134 = arith.addf %126, %133 : vector<1x256xf32>
      %c0_32 = arith.constant 0 : index
      %c109 = arith.constant 109 : index
      %135 = vector.load %arg6[%c0_32, %c109] : memref<1x512xf32, #tpu.memory_space<vmem>>, vector<1x256xf32>
      %136 = vector.broadcast %26 : f32 to vector<1x256xf32>
      %137 = arith.mulf %136, %135 : vector<1x256xf32>
      %138 = arith.addf %130, %137 : vector<1x256xf32>
      %c0_33 = arith.constant 0 : index
      %c109_34 = arith.constant 109 : index
      %139 = vector.load %arg7[%c0_33, %c109_34] : memref<1x512xf32, #tpu.memory_space<vmem>>, vector<1x256xf32>
      %140 = vector.broadcast %75 : f32 to vector<1x256xf32>
      %141 = arith.mulf %140, %139 : vector<1x256xf32>
      %142 = arith.addf %134, %141 : vector<1x256xf32>
      %c0_35 = arith.constant 0 : index
      %c125 = arith.constant 125 : index
      %143 = vector.load %arg6[%c0_35, %c125] : memref<1x512xf32, #tpu.memory_space<vmem>>, vector<1x256xf32>
      %144 = vector.broadcast %33 : f32 to vector<1x256xf32>
      %145 = arith.mulf %144, %143 : vector<1x256xf32>
      %146 = arith.addf %138, %145 : vector<1x256xf32>
      %c0_36 = arith.constant 0 : index
      %c125_37 = arith.constant 125 : index
      %147 = vector.load %arg7[%c0_36, %c125_37] : memref<1x512xf32, #tpu.memory_space<vmem>>, vector<1x256xf32>
      %148 = vector.broadcast %82 : f32 to vector<1x256xf32>
      %149 = arith.mulf %148, %147 : vector<1x256xf32>
      %150 = arith.addf %142, %149 : vector<1x256xf32>
      %c0_38 = arith.constant 0 : index
      %c141 = arith.constant 141 : index
      %151 = vector.load %arg6[%c0_38, %c141] : memref<1x512xf32, #tpu.memory_space<vmem>>, vector<1x256xf32>
      %152 = vector.broadcast %40 : f32 to vector<1x256xf32>
      %153 = arith.mulf %152, %151 : vector<1x256xf32>
      %154 = arith.addf %146, %153 : vector<1x256xf32>
      %c0_39 = arith.constant 0 : index
      %c141_40 = arith.constant 141 : index
      %155 = vector.load %arg7[%c0_39, %c141_40] : memref<1x512xf32, #tpu.memory_space<vmem>>, vector<1x256xf32>
      %156 = vector.broadcast %89 : f32 to vector<1x256xf32>
      %157 = arith.mulf %156, %155 : vector<1x256xf32>
      %158 = arith.addf %150, %157 : vector<1x256xf32>
      %c0_41 = arith.constant 0 : index
      %c157 = arith.constant 157 : index
      %159 = vector.load %arg6[%c0_41, %c157] : memref<1x512xf32, #tpu.memory_space<vmem>>, vector<1x256xf32>
      %160 = vector.broadcast %47 : f32 to vector<1x256xf32>
      %161 = arith.mulf %160, %159 : vector<1x256xf32>
      %162 = arith.addf %154, %161 : vector<1x256xf32>
      %c0_42 = arith.constant 0 : index
      %c157_43 = arith.constant 157 : index
      %163 = vector.load %arg7[%c0_42, %c157_43] : memref<1x512xf32, #tpu.memory_space<vmem>>, vector<1x256xf32>
      %164 = vector.broadcast %96 : f32 to vector<1x256xf32>
      %165 = arith.mulf %164, %163 : vector<1x256xf32>
      %166 = arith.addf %158, %165 : vector<1x256xf32>
      %c0_44 = arith.constant 0 : index
      %c173 = arith.constant 173 : index
      %167 = vector.load %arg6[%c0_44, %c173] : memref<1x512xf32, #tpu.memory_space<vmem>>, vector<1x256xf32>
      %168 = vector.broadcast %54 : f32 to vector<1x256xf32>
      %169 = arith.mulf %168, %167 : vector<1x256xf32>
      %170 = arith.addf %162, %169 : vector<1x256xf32>
      %c0_45 = arith.constant 0 : index
      %c173_46 = arith.constant 173 : index
      %171 = vector.load %arg7[%c0_45, %c173_46] : memref<1x512xf32, #tpu.memory_space<vmem>>, vector<1x256xf32>
      %172 = vector.broadcast %103 : f32 to vector<1x256xf32>
      %173 = arith.mulf %172, %171 : vector<1x256xf32>
      %174 = arith.addf %166, %173 : vector<1x256xf32>
      %175 = arith.addf %170, %174 : vector<1x256xf32>
      %176 = arith.mulf %175, %110 : vector<1x256xf32>
      %177 = arith.addf %116, %176 : vector<1x256xf32>
      %cst_47 = arith.constant 0.000000e+00 : f32
      %178 = vector.broadcast %cst_47 : f32 to vector<1x256xf32>
      %cst_48 = arith.constant 0.000000e+00 : f32
      %179 = vector.broadcast %cst_48 : f32 to vector<1x256xf32>
      %c0_49 = arith.constant 0 : index
      %c78_50 = arith.constant 78 : index
      %180 = vector.load %arg6[%c0_49, %c78_50] : memref<1x512xf32, #tpu.memory_space<vmem>>, vector<1x256xf32>
      %181 = vector.broadcast %13 : f32 to vector<1x256xf32>
      %182 = arith.mulf %181, %180 : vector<1x256xf32>
      %183 = arith.addf %178, %182 : vector<1x256xf32>
      %c0_51 = arith.constant 0 : index
      %c78_52 = arith.constant 78 : index
      %184 = vector.load %arg7[%c0_51, %c78_52] : memref<1x512xf32, #tpu.memory_space<vmem>>, vector<1x256xf32>
      %185 = vector.broadcast %62 : f32 to vector<1x256xf32>
      %186 = arith.mulf %185, %184 : vector<1x256xf32>
      %187 = arith.addf %179, %186 : vector<1x256xf32>
      %c0_53 = arith.constant 0 : index
      %c94_54 = arith.constant 94 : index
      %188 = vector.load %arg6[%c0_53, %c94_54] : memref<1x512xf32, #tpu.memory_space<vmem>>, vector<1x256xf32>
      %189 = vector.broadcast %20 : f32 to vector<1x256xf32>
      %190 = arith.mulf %189, %188 : vector<1x256xf32>
      %191 = arith.addf %183, %190 : vector<1x256xf32>
      %c0_55 = arith.constant 0 : index
      %c94_56 = arith.constant 94 : index
      %192 = vector.load %arg7[%c0_55, %c94_56] : memref<1x512xf32, #tpu.memory_space<vmem>>, vector<1x256xf32>
      %193 = vector.broadcast %69 : f32 to vector<1x256xf32>
      %194 = arith.mulf %193, %192 : vector<1x256xf32>
      %195 = arith.addf %187, %194 : vector<1x256xf32>
      %c0_57 = arith.constant 0 : index
      %c110 = arith.constant 110 : index
      %196 = vector.load %arg6[%c0_57, %c110] : memref<1x512xf32, #tpu.memory_space<vmem>>, vector<1x256xf32>
      %197 = vector.broadcast %27 : f32 to vector<1x256xf32>
      %198 = arith.mulf %197, %196 : vector<1x256xf32>
      %199 = arith.addf %191, %198 : vector<1x256xf32>
      %c0_58 = arith.constant 0 : index
      %c110_59 = arith.constant 110 : index
      %200 = vector.load %arg7[%c0_58, %c110_59] : memref<1x512xf32, #tpu.memory_space<vmem>>, vector<1x256xf32>
      %201 = vector.broadcast %76 : f32 to vector<1x256xf32>
      %202 = arith.mulf %201, %200 : vector<1x256xf32>
      %203 = arith.addf %195, %202 : vector<1x256xf32>
      %c0_60 = arith.constant 0 : index
      %c126 = arith.constant 126 : index
      %204 = vector.load %arg6[%c0_60, %c126] : memref<1x512xf32, #tpu.memory_space<vmem>>, vector<1x256xf32>
      %205 = vector.broadcast %34 : f32 to vector<1x256xf32>
      %206 = arith.mulf %205, %204 : vector<1x256xf32>
      %207 = arith.addf %199, %206 : vector<1x256xf32>
      %c0_61 = arith.constant 0 : index
      %c126_62 = arith.constant 126 : index
      %208 = vector.load %arg7[%c0_61, %c126_62] : memref<1x512xf32, #tpu.memory_space<vmem>>, vector<1x256xf32>
      %209 = vector.broadcast %83 : f32 to vector<1x256xf32>
      %210 = arith.mulf %209, %208 : vector<1x256xf32>
      %211 = arith.addf %203, %210 : vector<1x256xf32>
      %c0_63 = arith.constant 0 : index
      %c142 = arith.constant 142 : index
      %212 = vector.load %arg6[%c0_63, %c142] : memref<1x512xf32, #tpu.memory_space<vmem>>, vector<1x256xf32>
      %213 = vector.broadcast %41 : f32 to vector<1x256xf32>
      %214 = arith.mulf %213, %212 : vector<1x256xf32>
      %215 = arith.addf %207, %214 : vector<1x256xf32>
      %c0_64 = arith.constant 0 : index
      %c142_65 = arith.constant 142 : index
      %216 = vector.load %arg7[%c0_64, %c142_65] : memref<1x512xf32, #tpu.memory_space<vmem>>, vector<1x256xf32>
      %217 = vector.broadcast %90 : f32 to vector<1x256xf32>
      %218 = arith.mulf %217, %216 : vector<1x256xf32>
      %219 = arith.addf %211, %218 : vector<1x256xf32>
      %c0_66 = arith.constant 0 : index
      %c158 = arith.constant 158 : index
      %220 = vector.load %arg6[%c0_66, %c158] : memref<1x512xf32, #tpu.memory_space<vmem>>, vector<1x256xf32>
      %221 = vector.broadcast %48 : f32 to vector<1x256xf32>
      %222 = arith.mulf %221, %220 : vector<1x256xf32>
      %223 = arith.addf %215, %222 : vector<1x256xf32>
      %c0_67 = arith.constant 0 : index
      %c158_68 = arith.constant 158 : index
      %224 = vector.load %arg7[%c0_67, %c158_68] : memref<1x512xf32, #tpu.memory_space<vmem>>, vector<1x256xf32>
      %225 = vector.broadcast %97 : f32 to vector<1x256xf32>
      %226 = arith.mulf %225, %224 : vector<1x256xf32>
      %227 = arith.addf %219, %226 : vector<1x256xf32>
      %c0_69 = arith.constant 0 : index
      %c174 = arith.constant 174 : index
      %228 = vector.load %arg6[%c0_69, %c174] : memref<1x512xf32, #tpu.memory_space<vmem>>, vector<1x256xf32>
      %229 = vector.broadcast %55 : f32 to vector<1x256xf32>
      %230 = arith.mulf %229, %228 : vector<1x256xf32>
      %231 = arith.addf %223, %230 : vector<1x256xf32>
      %c0_70 = arith.constant 0 : index
      %c174_71 = arith.constant 174 : index
      %232 = vector.load %arg7[%c0_70, %c174_71] : memref<1x512xf32, #tpu.memory_space<vmem>>, vector<1x256xf32>
      %233 = vector.broadcast %104 : f32 to vector<1x256xf32>
      %234 = arith.mulf %233, %232 : vector<1x256xf32>
      %235 = arith.addf %227, %234 : vector<1x256xf32>
      %236 = arith.addf %231, %235 : vector<1x256xf32>
      %237 = arith.mulf %236, %111 : vector<1x256xf32>
      %238 = arith.addf %177, %237 : vector<1x256xf32>
      %cst_72 = arith.constant 0.000000e+00 : f32
      %239 = vector.broadcast %cst_72 : f32 to vector<1x256xf32>
      %cst_73 = arith.constant 0.000000e+00 : f32
      %240 = vector.broadcast %cst_73 : f32 to vector<1x256xf32>
      %c0_74 = arith.constant 0 : index
      %c79_75 = arith.constant 79 : index
      %241 = vector.load %arg6[%c0_74, %c79_75] : memref<1x512xf32, #tpu.memory_space<vmem>>, vector<1x256xf32>
      %242 = vector.broadcast %14 : f32 to vector<1x256xf32>
      %243 = arith.mulf %242, %241 : vector<1x256xf32>
      %244 = arith.addf %239, %243 : vector<1x256xf32>
      %c0_76 = arith.constant 0 : index
      %c79_77 = arith.constant 79 : index
      %245 = vector.load %arg7[%c0_76, %c79_77] : memref<1x512xf32, #tpu.memory_space<vmem>>, vector<1x256xf32>
      %246 = vector.broadcast %63 : f32 to vector<1x256xf32>
      %247 = arith.mulf %246, %245 : vector<1x256xf32>
      %248 = arith.addf %240, %247 : vector<1x256xf32>
      %c0_78 = arith.constant 0 : index
      %c95_79 = arith.constant 95 : index
      %249 = vector.load %arg6[%c0_78, %c95_79] : memref<1x512xf32, #tpu.memory_space<vmem>>, vector<1x256xf32>
      %250 = vector.broadcast %21 : f32 to vector<1x256xf32>
      %251 = arith.mulf %250, %249 : vector<1x256xf32>
      %252 = arith.addf %244, %251 : vector<1x256xf32>
      %c0_80 = arith.constant 0 : index
      %c95_81 = arith.constant 95 : index
      %253 = vector.load %arg7[%c0_80, %c95_81] : memref<1x512xf32, #tpu.memory_space<vmem>>, vector<1x256xf32>
      %254 = vector.broadcast %70 : f32 to vector<1x256xf32>
      %255 = arith.mulf %254, %253 : vector<1x256xf32>
      %256 = arith.addf %248, %255 : vector<1x256xf32>
      %c0_82 = arith.constant 0 : index
      %c111 = arith.constant 111 : index
      %257 = vector.load %arg6[%c0_82, %c111] : memref<1x512xf32, #tpu.memory_space<vmem>>, vector<1x256xf32>
      %258 = vector.broadcast %28 : f32 to vector<1x256xf32>
      %259 = arith.mulf %258, %257 : vector<1x256xf32>
      %260 = arith.addf %252, %259 : vector<1x256xf32>
      %c0_83 = arith.constant 0 : index
      %c111_84 = arith.constant 111 : index
      %261 = vector.load %arg7[%c0_83, %c111_84] : memref<1x512xf32, #tpu.memory_space<vmem>>, vector<1x256xf32>
      %262 = vector.broadcast %77 : f32 to vector<1x256xf32>
      %263 = arith.mulf %262, %261 : vector<1x256xf32>
      %264 = arith.addf %256, %263 : vector<1x256xf32>
      %c0_85 = arith.constant 0 : index
      %c127 = arith.constant 127 : index
      %265 = vector.load %arg6[%c0_85, %c127] : memref<1x512xf32, #tpu.memory_space<vmem>>, vector<1x256xf32>
      %266 = vector.broadcast %35 : f32 to vector<1x256xf32>
      %267 = arith.mulf %266, %265 : vector<1x256xf32>
      %268 = arith.addf %260, %267 : vector<1x256xf32>
      %c0_86 = arith.constant 0 : index
      %c127_87 = arith.constant 127 : index
      %269 = vector.load %arg7[%c0_86, %c127_87] : memref<1x512xf32, #tpu.memory_space<vmem>>, vector<1x256xf32>
      %270 = vector.broadcast %84 : f32 to vector<1x256xf32>
      %271 = arith.mulf %270, %269 : vector<1x256xf32>
      %272 = arith.addf %264, %271 : vector<1x256xf32>
      %c0_88 = arith.constant 0 : index
      %c143 = arith.constant 143 : index
      %273 = vector.load %arg6[%c0_88, %c143] : memref<1x512xf32, #tpu.memory_space<vmem>>, vector<1x256xf32>
      %274 = vector.broadcast %42 : f32 to vector<1x256xf32>
      %275 = arith.mulf %274, %273 : vector<1x256xf32>
      %276 = arith.addf %268, %275 : vector<1x256xf32>
      %c0_89 = arith.constant 0 : index
      %c143_90 = arith.constant 143 : index
      %277 = vector.load %arg7[%c0_89, %c143_90] : memref<1x512xf32, #tpu.memory_space<vmem>>, vector<1x256xf32>
      %278 = vector.broadcast %91 : f32 to vector<1x256xf32>
      %279 = arith.mulf %278, %277 : vector<1x256xf32>
      %280 = arith.addf %272, %279 : vector<1x256xf32>
      %c0_91 = arith.constant 0 : index
      %c159 = arith.constant 159 : index
      %281 = vector.load %arg6[%c0_91, %c159] : memref<1x512xf32, #tpu.memory_space<vmem>>, vector<1x256xf32>
      %282 = vector.broadcast %49 : f32 to vector<1x256xf32>
      %283 = arith.mulf %282, %281 : vector<1x256xf32>
      %284 = arith.addf %276, %283 : vector<1x256xf32>
      %c0_92 = arith.constant 0 : index
      %c159_93 = arith.constant 159 : index
      %285 = vector.load %arg7[%c0_92, %c159_93] : memref<1x512xf32, #tpu.memory_space<vmem>>, vector<1x256xf32>
      %286 = vector.broadcast %98 : f32 to vector<1x256xf32>
      %287 = arith.mulf %286, %285 : vector<1x256xf32>
      %288 = arith.addf %280, %287 : vector<1x256xf32>
      %c0_94 = arith.constant 0 : index
      %c175 = arith.constant 175 : index
      %289 = vector.load %arg6[%c0_94, %c175] : memref<1x512xf32, #tpu.memory_space<vmem>>, vector<1x256xf32>
      %290 = vector.broadcast %56 : f32 to vector<1x256xf32>
      %291 = arith.mulf %290, %289 : vector<1x256xf32>
      %292 = arith.addf %284, %291 : vector<1x256xf32>
      %c0_95 = arith.constant 0 : index
      %c175_96 = arith.constant 175 : index
      %293 = vector.load %arg7[%c0_95, %c175_96] : memref<1x512xf32, #tpu.memory_space<vmem>>, vector<1x256xf32>
      %294 = vector.broadcast %105 : f32 to vector<1x256xf32>
      %295 = arith.mulf %294, %293 : vector<1x256xf32>
      %296 = arith.addf %288, %295 : vector<1x256xf32>
      %297 = arith.addf %292, %296 : vector<1x256xf32>
      %298 = arith.mulf %297, %112 : vector<1x256xf32>
      %299 = arith.addf %238, %298 : vector<1x256xf32>
      %cst_97 = arith.constant 0.000000e+00 : f32
      %300 = vector.broadcast %cst_97 : f32 to vector<1x256xf32>
      %cst_98 = arith.constant 0.000000e+00 : f32
      %301 = vector.broadcast %cst_98 : f32 to vector<1x256xf32>
      %c0_99 = arith.constant 0 : index
      %c80_100 = arith.constant 80 : index
      %302 = vector.load %arg6[%c0_99, %c80_100] : memref<1x512xf32, #tpu.memory_space<vmem>>, vector<1x256xf32>
      %303 = vector.broadcast %15 : f32 to vector<1x256xf32>
      %304 = arith.mulf %303, %302 : vector<1x256xf32>
      %305 = arith.addf %300, %304 : vector<1x256xf32>
      %c0_101 = arith.constant 0 : index
      %c80_102 = arith.constant 80 : index
      %306 = vector.load %arg7[%c0_101, %c80_102] : memref<1x512xf32, #tpu.memory_space<vmem>>, vector<1x256xf32>
      %307 = vector.broadcast %64 : f32 to vector<1x256xf32>
      %308 = arith.mulf %307, %306 : vector<1x256xf32>
      %309 = arith.addf %301, %308 : vector<1x256xf32>
      %c0_103 = arith.constant 0 : index
      %c96_104 = arith.constant 96 : index
      %310 = vector.load %arg6[%c0_103, %c96_104] : memref<1x512xf32, #tpu.memory_space<vmem>>, vector<1x256xf32>
      %311 = vector.broadcast %22 : f32 to vector<1x256xf32>
      %312 = arith.mulf %311, %310 : vector<1x256xf32>
      %313 = arith.addf %305, %312 : vector<1x256xf32>
      %c0_105 = arith.constant 0 : index
      %c96_106 = arith.constant 96 : index
      %314 = vector.load %arg7[%c0_105, %c96_106] : memref<1x512xf32, #tpu.memory_space<vmem>>, vector<1x256xf32>
      %315 = vector.broadcast %71 : f32 to vector<1x256xf32>
      %316 = arith.mulf %315, %314 : vector<1x256xf32>
      %317 = arith.addf %309, %316 : vector<1x256xf32>
      %c0_107 = arith.constant 0 : index
      %c112 = arith.constant 112 : index
      %318 = vector.load %arg6[%c0_107, %c112] : memref<1x512xf32, #tpu.memory_space<vmem>>, vector<1x256xf32>
      %319 = vector.broadcast %29 : f32 to vector<1x256xf32>
      %320 = arith.mulf %319, %318 : vector<1x256xf32>
      %321 = arith.addf %313, %320 : vector<1x256xf32>
      %c0_108 = arith.constant 0 : index
      %c112_109 = arith.constant 112 : index
      %322 = vector.load %arg7[%c0_108, %c112_109] : memref<1x512xf32, #tpu.memory_space<vmem>>, vector<1x256xf32>
      %323 = vector.broadcast %78 : f32 to vector<1x256xf32>
      %324 = arith.mulf %323, %322 : vector<1x256xf32>
      %325 = arith.addf %317, %324 : vector<1x256xf32>
      %c0_110 = arith.constant 0 : index
      %c128 = arith.constant 128 : index
      %326 = vector.load %arg6[%c0_110, %c128] : memref<1x512xf32, #tpu.memory_space<vmem>>, vector<1x256xf32>
      %327 = vector.broadcast %36 : f32 to vector<1x256xf32>
      %328 = arith.mulf %327, %326 : vector<1x256xf32>
      %329 = arith.addf %321, %328 : vector<1x256xf32>
      %c0_111 = arith.constant 0 : index
      %c128_112 = arith.constant 128 : index
      %330 = vector.load %arg7[%c0_111, %c128_112] : memref<1x512xf32, #tpu.memory_space<vmem>>, vector<1x256xf32>
      %331 = vector.broadcast %85 : f32 to vector<1x256xf32>
      %332 = arith.mulf %331, %330 : vector<1x256xf32>
      %333 = arith.addf %325, %332 : vector<1x256xf32>
      %c0_113 = arith.constant 0 : index
      %c144 = arith.constant 144 : index
      %334 = vector.load %arg6[%c0_113, %c144] : memref<1x512xf32, #tpu.memory_space<vmem>>, vector<1x256xf32>
      %335 = vector.broadcast %43 : f32 to vector<1x256xf32>
      %336 = arith.mulf %335, %334 : vector<1x256xf32>
      %337 = arith.addf %329, %336 : vector<1x256xf32>
      %c0_114 = arith.constant 0 : index
      %c144_115 = arith.constant 144 : index
      %338 = vector.load %arg7[%c0_114, %c144_115] : memref<1x512xf32, #tpu.memory_space<vmem>>, vector<1x256xf32>
      %339 = vector.broadcast %92 : f32 to vector<1x256xf32>
      %340 = arith.mulf %339, %338 : vector<1x256xf32>
      %341 = arith.addf %333, %340 : vector<1x256xf32>
      %c0_116 = arith.constant 0 : index
      %c160 = arith.constant 160 : index
      %342 = vector.load %arg6[%c0_116, %c160] : memref<1x512xf32, #tpu.memory_space<vmem>>, vector<1x256xf32>
      %343 = vector.broadcast %50 : f32 to vector<1x256xf32>
      %344 = arith.mulf %343, %342 : vector<1x256xf32>
      %345 = arith.addf %337, %344 : vector<1x256xf32>
      %c0_117 = arith.constant 0 : index
      %c160_118 = arith.constant 160 : index
      %346 = vector.load %arg7[%c0_117, %c160_118] : memref<1x512xf32, #tpu.memory_space<vmem>>, vector<1x256xf32>
      %347 = vector.broadcast %99 : f32 to vector<1x256xf32>
      %348 = arith.mulf %347, %346 : vector<1x256xf32>
      %349 = arith.addf %341, %348 : vector<1x256xf32>
      %c0_119 = arith.constant 0 : index
      %c176 = arith.constant 176 : index
      %350 = vector.load %arg6[%c0_119, %c176] : memref<1x512xf32, #tpu.memory_space<vmem>>, vector<1x256xf32>
      %351 = vector.broadcast %57 : f32 to vector<1x256xf32>
      %352 = arith.mulf %351, %350 : vector<1x256xf32>
      %353 = arith.addf %345, %352 : vector<1x256xf32>
      %c0_120 = arith.constant 0 : index
      %c176_121 = arith.constant 176 : index
      %354 = vector.load %arg7[%c0_120, %c176_121] : memref<1x512xf32, #tpu.memory_space<vmem>>, vector<1x256xf32>
      %355 = vector.broadcast %106 : f32 to vector<1x256xf32>
      %356 = arith.mulf %355, %354 : vector<1x256xf32>
      %357 = arith.addf %349, %356 : vector<1x256xf32>
      %358 = arith.addf %353, %357 : vector<1x256xf32>
      %359 = arith.addf %299, %358 : vector<1x256xf32>
      %cst_122 = arith.constant 0.000000e+00 : f32
      %360 = vector.broadcast %cst_122 : f32 to vector<1x256xf32>
      %cst_123 = arith.constant 0.000000e+00 : f32
      %361 = vector.broadcast %cst_123 : f32 to vector<1x256xf32>
      %c0_124 = arith.constant 0 : index
      %c81_125 = arith.constant 81 : index
      %362 = vector.load %arg6[%c0_124, %c81_125] : memref<1x512xf32, #tpu.memory_space<vmem>>, vector<1x256xf32>
      %363 = vector.broadcast %16 : f32 to vector<1x256xf32>
      %364 = arith.mulf %363, %362 : vector<1x256xf32>
      %365 = arith.addf %360, %364 : vector<1x256xf32>
      %c0_126 = arith.constant 0 : index
      %c81_127 = arith.constant 81 : index
      %366 = vector.load %arg7[%c0_126, %c81_127] : memref<1x512xf32, #tpu.memory_space<vmem>>, vector<1x256xf32>
      %367 = vector.broadcast %65 : f32 to vector<1x256xf32>
      %368 = arith.mulf %367, %366 : vector<1x256xf32>
      %369 = arith.addf %361, %368 : vector<1x256xf32>
      %c0_128 = arith.constant 0 : index
      %c97_129 = arith.constant 97 : index
      %370 = vector.load %arg6[%c0_128, %c97_129] : memref<1x512xf32, #tpu.memory_space<vmem>>, vector<1x256xf32>
      %371 = vector.broadcast %23 : f32 to vector<1x256xf32>
      %372 = arith.mulf %371, %370 : vector<1x256xf32>
      %373 = arith.addf %365, %372 : vector<1x256xf32>
      %c0_130 = arith.constant 0 : index
      %c97_131 = arith.constant 97 : index
      %374 = vector.load %arg7[%c0_130, %c97_131] : memref<1x512xf32, #tpu.memory_space<vmem>>, vector<1x256xf32>
      %375 = vector.broadcast %72 : f32 to vector<1x256xf32>
      %376 = arith.mulf %375, %374 : vector<1x256xf32>
      %377 = arith.addf %369, %376 : vector<1x256xf32>
      %c0_132 = arith.constant 0 : index
      %c113 = arith.constant 113 : index
      %378 = vector.load %arg6[%c0_132, %c113] : memref<1x512xf32, #tpu.memory_space<vmem>>, vector<1x256xf32>
      %379 = vector.broadcast %30 : f32 to vector<1x256xf32>
      %380 = arith.mulf %379, %378 : vector<1x256xf32>
      %381 = arith.addf %373, %380 : vector<1x256xf32>
      %c0_133 = arith.constant 0 : index
      %c113_134 = arith.constant 113 : index
      %382 = vector.load %arg7[%c0_133, %c113_134] : memref<1x512xf32, #tpu.memory_space<vmem>>, vector<1x256xf32>
      %383 = vector.broadcast %79 : f32 to vector<1x256xf32>
      %384 = arith.mulf %383, %382 : vector<1x256xf32>
      %385 = arith.addf %377, %384 : vector<1x256xf32>
      %c0_135 = arith.constant 0 : index
      %c129 = arith.constant 129 : index
      %386 = vector.load %arg6[%c0_135, %c129] : memref<1x512xf32, #tpu.memory_space<vmem>>, vector<1x256xf32>
      %387 = vector.broadcast %37 : f32 to vector<1x256xf32>
      %388 = arith.mulf %387, %386 : vector<1x256xf32>
      %389 = arith.addf %381, %388 : vector<1x256xf32>
      %c0_136 = arith.constant 0 : index
      %c129_137 = arith.constant 129 : index
      %390 = vector.load %arg7[%c0_136, %c129_137] : memref<1x512xf32, #tpu.memory_space<vmem>>, vector<1x256xf32>
      %391 = vector.broadcast %86 : f32 to vector<1x256xf32>
      %392 = arith.mulf %391, %390 : vector<1x256xf32>
      %393 = arith.addf %385, %392 : vector<1x256xf32>
      %c0_138 = arith.constant 0 : index
      %c145 = arith.constant 145 : index
      %394 = vector.load %arg6[%c0_138, %c145] : memref<1x512xf32, #tpu.memory_space<vmem>>, vector<1x256xf32>
      %395 = vector.broadcast %44 : f32 to vector<1x256xf32>
      %396 = arith.mulf %395, %394 : vector<1x256xf32>
      %397 = arith.addf %389, %396 : vector<1x256xf32>
      %c0_139 = arith.constant 0 : index
      %c145_140 = arith.constant 145 : index
      %398 = vector.load %arg7[%c0_139, %c145_140] : memref<1x512xf32, #tpu.memory_space<vmem>>, vector<1x256xf32>
      %399 = vector.broadcast %93 : f32 to vector<1x256xf32>
      %400 = arith.mulf %399, %398 : vector<1x256xf32>
      %401 = arith.addf %393, %400 : vector<1x256xf32>
      %c0_141 = arith.constant 0 : index
      %c161 = arith.constant 161 : index
      %402 = vector.load %arg6[%c0_141, %c161] : memref<1x512xf32, #tpu.memory_space<vmem>>, vector<1x256xf32>
      %403 = vector.broadcast %51 : f32 to vector<1x256xf32>
      %404 = arith.mulf %403, %402 : vector<1x256xf32>
      %405 = arith.addf %397, %404 : vector<1x256xf32>
      %c0_142 = arith.constant 0 : index
      %c161_143 = arith.constant 161 : index
      %406 = vector.load %arg7[%c0_142, %c161_143] : memref<1x512xf32, #tpu.memory_space<vmem>>, vector<1x256xf32>
      %407 = vector.broadcast %100 : f32 to vector<1x256xf32>
      %408 = arith.mulf %407, %406 : vector<1x256xf32>
      %409 = arith.addf %401, %408 : vector<1x256xf32>
      %c0_144 = arith.constant 0 : index
      %c177 = arith.constant 177 : index
      %410 = vector.load %arg6[%c0_144, %c177] : memref<1x512xf32, #tpu.memory_space<vmem>>, vector<1x256xf32>
      %411 = vector.broadcast %58 : f32 to vector<1x256xf32>
      %412 = arith.mulf %411, %410 : vector<1x256xf32>
      %413 = arith.addf %405, %412 : vector<1x256xf32>
      %c0_145 = arith.constant 0 : index
      %c177_146 = arith.constant 177 : index
      %414 = vector.load %arg7[%c0_145, %c177_146] : memref<1x512xf32, #tpu.memory_space<vmem>>, vector<1x256xf32>
      %415 = vector.broadcast %107 : f32 to vector<1x256xf32>
      %416 = arith.mulf %415, %414 : vector<1x256xf32>
      %417 = arith.addf %409, %416 : vector<1x256xf32>
      %418 = arith.addf %413, %417 : vector<1x256xf32>
      %419 = arith.mulf %418, %113 : vector<1x256xf32>
      %420 = arith.addf %359, %419 : vector<1x256xf32>
      %cst_147 = arith.constant 0.000000e+00 : f32
      %421 = vector.broadcast %cst_147 : f32 to vector<1x256xf32>
      %cst_148 = arith.constant 0.000000e+00 : f32
      %422 = vector.broadcast %cst_148 : f32 to vector<1x256xf32>
      %c0_149 = arith.constant 0 : index
      %c82_150 = arith.constant 82 : index
      %423 = vector.load %arg6[%c0_149, %c82_150] : memref<1x512xf32, #tpu.memory_space<vmem>>, vector<1x256xf32>
      %424 = vector.broadcast %17 : f32 to vector<1x256xf32>
      %425 = arith.mulf %424, %423 : vector<1x256xf32>
      %426 = arith.addf %421, %425 : vector<1x256xf32>
      %c0_151 = arith.constant 0 : index
      %c82_152 = arith.constant 82 : index
      %427 = vector.load %arg7[%c0_151, %c82_152] : memref<1x512xf32, #tpu.memory_space<vmem>>, vector<1x256xf32>
      %428 = vector.broadcast %66 : f32 to vector<1x256xf32>
      %429 = arith.mulf %428, %427 : vector<1x256xf32>
      %430 = arith.addf %422, %429 : vector<1x256xf32>
      %c0_153 = arith.constant 0 : index
      %c98 = arith.constant 98 : index
      %431 = vector.load %arg6[%c0_153, %c98] : memref<1x512xf32, #tpu.memory_space<vmem>>, vector<1x256xf32>
      %432 = vector.broadcast %24 : f32 to vector<1x256xf32>
      %433 = arith.mulf %432, %431 : vector<1x256xf32>
      %434 = arith.addf %426, %433 : vector<1x256xf32>
      %c0_154 = arith.constant 0 : index
      %c98_155 = arith.constant 98 : index
      %435 = vector.load %arg7[%c0_154, %c98_155] : memref<1x512xf32, #tpu.memory_space<vmem>>, vector<1x256xf32>
      %436 = vector.broadcast %73 : f32 to vector<1x256xf32>
      %437 = arith.mulf %436, %435 : vector<1x256xf32>
      %438 = arith.addf %430, %437 : vector<1x256xf32>
      %c0_156 = arith.constant 0 : index
      %c114 = arith.constant 114 : index
      %439 = vector.load %arg6[%c0_156, %c114] : memref<1x512xf32, #tpu.memory_space<vmem>>, vector<1x256xf32>
      %440 = vector.broadcast %31 : f32 to vector<1x256xf32>
      %441 = arith.mulf %440, %439 : vector<1x256xf32>
      %442 = arith.addf %434, %441 : vector<1x256xf32>
      %c0_157 = arith.constant 0 : index
      %c114_158 = arith.constant 114 : index
      %443 = vector.load %arg7[%c0_157, %c114_158] : memref<1x512xf32, #tpu.memory_space<vmem>>, vector<1x256xf32>
      %444 = vector.broadcast %80 : f32 to vector<1x256xf32>
      %445 = arith.mulf %444, %443 : vector<1x256xf32>
      %446 = arith.addf %438, %445 : vector<1x256xf32>
      %c0_159 = arith.constant 0 : index
      %c130 = arith.constant 130 : index
      %447 = vector.load %arg6[%c0_159, %c130] : memref<1x512xf32, #tpu.memory_space<vmem>>, vector<1x256xf32>
      %448 = vector.broadcast %38 : f32 to vector<1x256xf32>
      %449 = arith.mulf %448, %447 : vector<1x256xf32>
      %450 = arith.addf %442, %449 : vector<1x256xf32>
      %c0_160 = arith.constant 0 : index
      %c130_161 = arith.constant 130 : index
      %451 = vector.load %arg7[%c0_160, %c130_161] : memref<1x512xf32, #tpu.memory_space<vmem>>, vector<1x256xf32>
      %452 = vector.broadcast %87 : f32 to vector<1x256xf32>
      %453 = arith.mulf %452, %451 : vector<1x256xf32>
      %454 = arith.addf %446, %453 : vector<1x256xf32>
      %c0_162 = arith.constant 0 : index
      %c146 = arith.constant 146 : index
      %455 = vector.load %arg6[%c0_162, %c146] : memref<1x512xf32, #tpu.memory_space<vmem>>, vector<1x256xf32>
      %456 = vector.broadcast %45 : f32 to vector<1x256xf32>
      %457 = arith.mulf %456, %455 : vector<1x256xf32>
      %458 = arith.addf %450, %457 : vector<1x256xf32>
      %c0_163 = arith.constant 0 : index
      %c146_164 = arith.constant 146 : index
      %459 = vector.load %arg7[%c0_163, %c146_164] : memref<1x512xf32, #tpu.memory_space<vmem>>, vector<1x256xf32>
      %460 = vector.broadcast %94 : f32 to vector<1x256xf32>
      %461 = arith.mulf %460, %459 : vector<1x256xf32>
      %462 = arith.addf %454, %461 : vector<1x256xf32>
      %c0_165 = arith.constant 0 : index
      %c162 = arith.constant 162 : index
      %463 = vector.load %arg6[%c0_165, %c162] : memref<1x512xf32, #tpu.memory_space<vmem>>, vector<1x256xf32>
      %464 = vector.broadcast %52 : f32 to vector<1x256xf32>
      %465 = arith.mulf %464, %463 : vector<1x256xf32>
      %466 = arith.addf %458, %465 : vector<1x256xf32>
      %c0_166 = arith.constant 0 : index
      %c162_167 = arith.constant 162 : index
      %467 = vector.load %arg7[%c0_166, %c162_167] : memref<1x512xf32, #tpu.memory_space<vmem>>, vector<1x256xf32>
      %468 = vector.broadcast %101 : f32 to vector<1x256xf32>
      %469 = arith.mulf %468, %467 : vector<1x256xf32>
      %470 = arith.addf %462, %469 : vector<1x256xf32>
      %c0_168 = arith.constant 0 : index
      %c178 = arith.constant 178 : index
      %471 = vector.load %arg6[%c0_168, %c178] : memref<1x512xf32, #tpu.memory_space<vmem>>, vector<1x256xf32>
      %472 = vector.broadcast %59 : f32 to vector<1x256xf32>
      %473 = arith.mulf %472, %471 : vector<1x256xf32>
      %474 = arith.addf %466, %473 : vector<1x256xf32>
      %c0_169 = arith.constant 0 : index
      %c178_170 = arith.constant 178 : index
      %475 = vector.load %arg7[%c0_169, %c178_170] : memref<1x512xf32, #tpu.memory_space<vmem>>, vector<1x256xf32>
      %476 = vector.broadcast %108 : f32 to vector<1x256xf32>
      %477 = arith.mulf %476, %475 : vector<1x256xf32>
      %478 = arith.addf %470, %477 : vector<1x256xf32>
      %479 = arith.addf %474, %478 : vector<1x256xf32>
      %480 = arith.mulf %479, %114 : vector<1x256xf32>
      %481 = arith.addf %420, %480 : vector<1x256xf32>
      %cst_171 = arith.constant 0.000000e+00 : f32
      %482 = vector.broadcast %cst_171 : f32 to vector<1x256xf32>
      %cst_172 = arith.constant 0.000000e+00 : f32
      %483 = vector.broadcast %cst_172 : f32 to vector<1x256xf32>
      %c0_173 = arith.constant 0 : index
      %c83_174 = arith.constant 83 : index
      %484 = vector.load %arg6[%c0_173, %c83_174] : memref<1x512xf32, #tpu.memory_space<vmem>>, vector<1x256xf32>
      %485 = vector.broadcast %18 : f32 to vector<1x256xf32>
      %486 = arith.mulf %485, %484 : vector<1x256xf32>
      %487 = arith.addf %482, %486 : vector<1x256xf32>
      %c0_175 = arith.constant 0 : index
      %c83_176 = arith.constant 83 : index
      %488 = vector.load %arg7[%c0_175, %c83_176] : memref<1x512xf32, #tpu.memory_space<vmem>>, vector<1x256xf32>
      %489 = vector.broadcast %67 : f32 to vector<1x256xf32>
      %490 = arith.mulf %489, %488 : vector<1x256xf32>
      %491 = arith.addf %483, %490 : vector<1x256xf32>
      %c0_177 = arith.constant 0 : index
      %c99 = arith.constant 99 : index
      %492 = vector.load %arg6[%c0_177, %c99] : memref<1x512xf32, #tpu.memory_space<vmem>>, vector<1x256xf32>
      %493 = vector.broadcast %25 : f32 to vector<1x256xf32>
      %494 = arith.mulf %493, %492 : vector<1x256xf32>
      %495 = arith.addf %487, %494 : vector<1x256xf32>
      %c0_178 = arith.constant 0 : index
      %c99_179 = arith.constant 99 : index
      %496 = vector.load %arg7[%c0_178, %c99_179] : memref<1x512xf32, #tpu.memory_space<vmem>>, vector<1x256xf32>
      %497 = vector.broadcast %74 : f32 to vector<1x256xf32>
      %498 = arith.mulf %497, %496 : vector<1x256xf32>
      %499 = arith.addf %491, %498 : vector<1x256xf32>
      %c0_180 = arith.constant 0 : index
      %c115 = arith.constant 115 : index
      %500 = vector.load %arg6[%c0_180, %c115] : memref<1x512xf32, #tpu.memory_space<vmem>>, vector<1x256xf32>
      %501 = vector.broadcast %32 : f32 to vector<1x256xf32>
      %502 = arith.mulf %501, %500 : vector<1x256xf32>
      %503 = arith.addf %495, %502 : vector<1x256xf32>
      %c0_181 = arith.constant 0 : index
      %c115_182 = arith.constant 115 : index
      %504 = vector.load %arg7[%c0_181, %c115_182] : memref<1x512xf32, #tpu.memory_space<vmem>>, vector<1x256xf32>
      %505 = vector.broadcast %81 : f32 to vector<1x256xf32>
      %506 = arith.mulf %505, %504 : vector<1x256xf32>
      %507 = arith.addf %499, %506 : vector<1x256xf32>
      %c0_183 = arith.constant 0 : index
      %c131 = arith.constant 131 : index
      %508 = vector.load %arg6[%c0_183, %c131] : memref<1x512xf32, #tpu.memory_space<vmem>>, vector<1x256xf32>
      %509 = vector.broadcast %39 : f32 to vector<1x256xf32>
      %510 = arith.mulf %509, %508 : vector<1x256xf32>
      %511 = arith.addf %503, %510 : vector<1x256xf32>
      %c0_184 = arith.constant 0 : index
      %c131_185 = arith.constant 131 : index
      %512 = vector.load %arg7[%c0_184, %c131_185] : memref<1x512xf32, #tpu.memory_space<vmem>>, vector<1x256xf32>
      %513 = vector.broadcast %88 : f32 to vector<1x256xf32>
      %514 = arith.mulf %513, %512 : vector<1x256xf32>
      %515 = arith.addf %507, %514 : vector<1x256xf32>
      %c0_186 = arith.constant 0 : index
      %c147 = arith.constant 147 : index
      %516 = vector.load %arg6[%c0_186, %c147] : memref<1x512xf32, #tpu.memory_space<vmem>>, vector<1x256xf32>
      %517 = vector.broadcast %46 : f32 to vector<1x256xf32>
      %518 = arith.mulf %517, %516 : vector<1x256xf32>
      %519 = arith.addf %511, %518 : vector<1x256xf32>
      %c0_187 = arith.constant 0 : index
      %c147_188 = arith.constant 147 : index
      %520 = vector.load %arg7[%c0_187, %c147_188] : memref<1x512xf32, #tpu.memory_space<vmem>>, vector<1x256xf32>
      %521 = vector.broadcast %95 : f32 to vector<1x256xf32>
      %522 = arith.mulf %521, %520 : vector<1x256xf32>
      %523 = arith.addf %515, %522 : vector<1x256xf32>
      %c0_189 = arith.constant 0 : index
      %c163 = arith.constant 163 : index
      %524 = vector.load %arg6[%c0_189, %c163] : memref<1x512xf32, #tpu.memory_space<vmem>>, vector<1x256xf32>
      %525 = vector.broadcast %53 : f32 to vector<1x256xf32>
      %526 = arith.mulf %525, %524 : vector<1x256xf32>
      %527 = arith.addf %519, %526 : vector<1x256xf32>
      %c0_190 = arith.constant 0 : index
      %c163_191 = arith.constant 163 : index
      %528 = vector.load %arg7[%c0_190, %c163_191] : memref<1x512xf32, #tpu.memory_space<vmem>>, vector<1x256xf32>
      %529 = vector.broadcast %102 : f32 to vector<1x256xf32>
      %530 = arith.mulf %529, %528 : vector<1x256xf32>
      %531 = arith.addf %523, %530 : vector<1x256xf32>
      %c0_192 = arith.constant 0 : index
      %c179 = arith.constant 179 : index
      %532 = vector.load %arg6[%c0_192, %c179] : memref<1x512xf32, #tpu.memory_space<vmem>>, vector<1x256xf32>
      %533 = vector.broadcast %60 : f32 to vector<1x256xf32>
      %534 = arith.mulf %533, %532 : vector<1x256xf32>
      %535 = arith.addf %527, %534 : vector<1x256xf32>
      %c0_193 = arith.constant 0 : index
      %c179_194 = arith.constant 179 : index
      %536 = vector.load %arg7[%c0_193, %c179_194] : memref<1x512xf32, #tpu.memory_space<vmem>>, vector<1x256xf32>
      %537 = vector.broadcast %109 : f32 to vector<1x256xf32>
      %538 = arith.mulf %537, %536 : vector<1x256xf32>
      %539 = arith.addf %531, %538 : vector<1x256xf32>
      %540 = arith.addf %535, %539 : vector<1x256xf32>
      %541 = arith.mulf %540, %115 : vector<1x256xf32>
      %542 = arith.addf %481, %541 : vector<1x256xf32>
      %543 = arith.negf %542 : vector<1x256xf32>
      %544 = math.exp %543 : vector<1x256xf32>
      %cst_195 = arith.constant 1.000000e+00 : f32
      %545 = vector.broadcast %cst_195 : f32 to vector<1x256xf32>
      %546 = arith.addf %545, %544 : vector<1x256xf32>
      %547 = arith.divf %545, %546 : vector<1x256xf32>
      %c0_196 = arith.constant 0 : index
      %c0_197 = arith.constant 0 : index
      %c0_198 = arith.constant 0 : index
      %548 = vector.load %arg5[%c0_196, %c0_197, %c0_198] : memref<1x1x256xf32, #tpu.memory_space<vmem>>, vector<1x1x256xf32>
      %549 = vector.shape_cast %548 : vector<1x1x256xf32> to vector<1x256xf32>
      %550 = vector.shape_cast %547 : vector<1x256xf32> to vector<1x1x256xf32>
      tpu.vector_store %arg5[%c0_196, %c0_197, %c0_198], %550 {strides = array<i32>} : memref<1x1x256xf32, #tpu.memory_space<vmem>>, vector<1x1x256xf32>,
    } else {
    }
    return
  }
  func.func @transform_0(%arg0: i32, %arg1: i32) -> i32 {
    %c0_i32 = arith.constant 0 : i32
    %c0_i32_0 = arith.constant 0 : i32
    return %c0_i32 : i32
  }
  func.func @transform_1(%arg0: i32, %arg1: i32) -> (i32, i32) {
    %c0_i32 = arith.constant 0 : i32
    %c0_i32_0 = arith.constant 0 : i32
    %c0_i32_1 = arith.constant 0 : i32
    return %c0_i32, %c0_i32_0 : i32, i32
  }
  func.func @transform_2(%arg0: i32, %arg1: i32) -> (i32, i32, i32) {
    %c0_i32 = arith.constant 0 : i32
    %c0_i32_0 = arith.constant 0 : i32
    return %arg0, %arg1, %c0_i32 : i32, i32, i32
  }
  func.func @transform_3(%arg0: i32, %arg1: i32) -> (i32, i32, i32) {
    %c0_i32 = arith.constant 0 : i32
    %c0_i32_0 = arith.constant 0 : i32
    %c0_i32_1 = arith.constant 0 : i32
    return %arg0, %c0_i32, %c0_i32_0 : i32, i32, i32
  }
}

</mosaic_0001>

<llo_original>
// kernel: tpu_custom_call.1
$region0: #{tpu_custom_call.1}
  #allocation0 [shape = 'u32[]', space=smem, size = 0x4, offset = 0x4, fixed_abs, tag = 'smem constant byte address 0x4 - core index']
  #allocation1 [shape = 'u32[144,128]{1,0:T(1,128)}', space=vmem, size = 0x12000, scoped, tag = 'internal scratch']
  #allocation2 [shape = 'f32[1,512]{1,0:T(1,128)}', space=vmem, size = 0x800, scoped, tag = 'scratch operand']
  #allocation3 [shape = 'f32[1,512]{1,0:T(1,128)}', space=vmem, size = 0x800, scoped, tag = 'scratch operand']
  %s0 = inlined_call_operand.hbm [shape: f32[98], index: 0, kind: input, shape index: {}]
  %s1 = inlined_call_operand.hbm [shape: f32[7,256], index: 1, kind: input, shape index: {}]
  %s2 = inlined_call_operand.hbm [shape: f32[2,4,256], index: 2, kind: input, shape index: {}]
  %s3 = inlined_call_operand.hbm [shape: f32[2,1,256], index: 3, kind: output, shape index: {}]
  %s4 = sld [smem:[#allocation0]]
  $region69: #{tpu_custom_call.1} parent=0
    _
  %s6 = ssub.s32 1, %s4
  %s7 = scalar_select 0, %s6, %s4
  $region1: #{tpu_custom_call.1} parent=0
    #allocation4 [shape = 'u8[512]{0}', space=smem, size = 0x200, scoped, tag = 'input window, operand 0, single buffered']
    #allocation5 [shape = 's32[2]{0}', space=sflag, size = 0x8, scoped, tag = 'scoped memory for tpu_custom_call.1']
    #allocation6 [shape = 's32[2]{0}', space=sflag, size = 0x8, scoped, tag = 'scoped memory for tpu_custom_call.1']
    #allocation7 [shape = 's32[2]{0}', space=sflag, size = 0x8, scoped, tag = 'scoped memory for tpu_custom_call.1']
    #allocation8 [shape = 'u8[8192]{0}', space=vmem, size = 0x2000, scoped, tag = 'input window, operand 1, single buffered']
    #allocation9 [shape = 'u8[8192]{0}', space=vmem, size = 0x2000, scoped, tag = 'input window, operand 2']
    #allocation10 [shape = 's32[2]{0}', space=sflag, size = 0x8, scoped, tag = 'scoped memory for tpu_custom_call.1']
    #allocation11 [shape = 'u8[2048]{0}', space=vmem, size = 0x800, scoped, tag = 'output window, operand 0']
    %8 = vsyncpa [#allocation7], 0
    %9 = vsyncpa [#allocation5], 0
    %10 = vsyncpa [#allocation10], 0
    %s11 = scalar_lea.sflag [#allocation10], 1
    %12 = vsyncpa %s11, 0
    %13 = vsyncpa [#allocation6], 0
    %s14 = scalar_lea.sflag [#allocation6], 1
    %15 = vsyncpa %s14, 0
    loop: start=0, step=1, limit=4
    $region2: #{tpu_custom_call.1} parent=1 // loop_pre_header
      _
    $region3: #{tpu_custom_call.1} parent=1 // loop_header
      %s17 = sphi 0, %s21
      %p18 = scmp.ge.s32.totalorder %s17, 4
      %s24 = sphi 0, %s36
      %s25 = sphi 0, %s32
      %s26 = sphi 0, %s24
      %s27 = sphi 0, %s25
      %s28 = sphi 0, %s26
      %s29 = sphi 0, %s27
      %s37 = sphi 0, %s37
      %s39 = sphi 0, %s37
      %s40 = sphi 0, %s39
      %s54 = sphi 0, %s40
      %s58 = sphi 0, %s58
      %s60 = sphi 0, %s58
      %s61 = sphi 0, %s60
      %s75 = sphi 0, %s61
      %s83 = sphi 0, %s85
      %s86 = sphi 0, %s83
      %s87 = sphi 0, %s86
      %s103 = sphi 0, %s87
      %s109 = sphi 0, %s111
      %s112 = sphi 0, %s109
      %s113 = sphi 0, %s112
      %s129 = sphi 0, %s113
    $region4: #{tpu_custom_call.1} parent=1 // loop_header_branch
      %20 = sbr.rel (%p18) target = $region8
    $region5: #{tpu_custom_call.1} parent=1 // loop_body
      %s22 = ssub.s32 %s17, 1
      %s23 = ssub.s32 %s17, 2
      %s30 = sadd.s32 1, %s25
      %p31 = scmp.ge.s32.totalorder %s30, 1
      %s32 = scalar_select %p31, 0, %s30
      %s33 = sadd.s32 1, %s24
      %s34 = scalar_select %p31, %s33, %s24
      %p35 = scmp.ge.s32.totalorder %s34, 2
      %s36 = scalar_select %p35, 0, %s34
      %s38 = sadd.s32 %s37, 1
      %p41 = scmp.eq.s32.totalorder %s17, 1
      %p42 = scmp.ne.s32.totalorder %s37, %s39
      %p43 = scmp.eq.s32.totalorder %s17, 0
      %p44 = por %p42, %p43
      %p45 = scmp.ne.s32.totalorder %s37, %s39
      %p46 = scmp.eq.s32.totalorder %s22, 1
      %p47 = por %p45, %p46
      %p48 = scmp.ne.s32.totalorder %s39, %s40
      %p49 = scmp.eq.s32.totalorder %s22, 0
      %p50 = por %p48, %p49
      %p51 = scmp.ne.s32.totalorder %s39, %s40
      %p52 = scmp.eq.s32.totalorder %s23, 1
      %p53 = por %p51, %p52
      %p55 = scmp.ne.s32.totalorder %s40, %s54
      %p56 = scmp.eq.s32.totalorder %s23, 0
      %p57 = por %p55, %p56
      %s59 = sadd.s32 %s58, 1
      %p62 = scmp.eq.s32.totalorder %s17, 1
      %p63 = scmp.ne.s32.totalorder %s58, %s60
      %p64 = scmp.eq.s32.totalorder %s17, 0
      %p65 = por %p63, %p64
      %p66 = scmp.ne.s32.totalorder %s58, %s60
      %p67 = scmp.eq.s32.totalorder %s22, 1
      %p68 = por %p66, %p67
      %p69 = scmp.ne.s32.totalorder %s60, %s61
      %p70 = scmp.eq.s32.totalorder %s22, 0
      %p71 = por %p69, %p70
      %p72 = scmp.ne.s32.totalorder %s60, %s61
      %p73 = scmp.eq.s32.totalorder %s23, 1
      %p74 = por %p72, %p73
      %p76 = scmp.ne.s32.totalorder %s61, %s75
      %p77 = scmp.eq.s32.totalorder %s23, 0
      %p78 = por %p76, %p77
      %s79 = ssub.s32 %s24, %s36
      %s80 = ssub.s32 %s25, %s32
      %s81 = sor.u32 %s79, %s80
      %p82 = scmp.eq.s32.totalorder %s81, 0
      %s84 = sadd.s32 %s83, 1
      %s85 = scalar_select %p82, %s83, %s84
      %p88 = pneg %p82
      %p89 = scmp.eq.s32.totalorder %s17, 1
      %p90 = por %p88, %p89
      %p91 = scmp.ne.s32.totalorder %s83, %s86
      %p92 = scmp.eq.s32.totalorder %s17, 0
      %p93 = por %p91, %p92
      %p94 = scmp.ne.s32.totalorder %s83, %s86
      %p95 = scmp.eq.s32.totalorder %s22, 1
      %p96 = por %p94, %p95
      %p97 = scmp.ne.s32.totalorder %s86, %s87
      %p98 = scmp.eq.s32.totalorder %s22, 0
      %p99 = por %p97, %p98
      %p100 = scmp.ne.s32.totalorder %s86, %s87
      %p101 = scmp.eq.s32.totalorder %s23, 1
      %p102 = por %p100, %p101
      %p104 = scmp.ne.s32.totalorder %s87, %s103
      %p105 = scmp.eq.s32.totalorder %s23, 0
      %p106 = por %p104, %p105
      %s107 = ssub.s32 %s24, %s36
      %p108 = scmp.eq.s32.totalorder %s107, 0
      %s110 = sadd.s32 %s109, 1
      %s111 = scalar_select %p108, %s109, %s110
      %p114 = pneg %p108
      %p115 = scmp.eq.s32.totalorder %s17, 1
      %p116 = por %p114, %p115
      %p117 = scmp.ne.s32.totalorder %s109, %s112
      %p118 = scmp.eq.s32.totalorder %s17, 0
      %p119 = por %p117, %p118
      %p120 = scmp.ne.s32.totalorder %s109, %s112
      %p121 = scmp.eq.s32.totalorder %s22, 1
      %p122 = por %p120, %p121
      %p123 = scmp.ne.s32.totalorder %s112, %s113
      %p124 = scmp.eq.s32.totalorder %s22, 0
      %p125 = por %p123, %p124
      %p126 = scmp.ne.s32.totalorder %s112, %s113
      %p127 = scmp.eq.s32.totalorder %s23, 1
      %p128 = por %p126, %p127
      %p130 = scmp.ne.s32.totalorder %s113, %s129
      %p131 = scmp.eq.s32.totalorder %s23, 0
      %p132 = por %p130, %p131
      %p133 = scmp.le.s32.totalorder 1, %s17
      %p134 = scmp.lt.s32.totalorder %s17, 3
      %p135 = pnand %p133, %p134
      %p136 = pneg %p135
      // Predicated region
      $region9: #{tpu_custom_call.1} parent=5 // pred_check
        _
      $region10: #{tpu_custom_call.1} parent=5 // pred_check_branch
        %138 = sbr.rel (%p135) target = $region12
      $region11: #{tpu_custom_call.1} parent=5 // pred_region
        %s139 = ssub.s32 %s17, 1
        // Predicated region
        $region13: #{tpu_custom_call.1} parent=11 // pred_check
          %p140 = pneg %p50
        $region14: #{tpu_custom_call.1} parent=11 // pred_check_branch
          %142 = sbr.rel (%p140) target = $region16
        $region15: #{tpu_custom_call.1} parent=11 // pred_region
          %s144 = ssub.s32 16, 16
          %145 = vsyncadd [#allocation7], %s144
          %148 = dma.hbm_to_smem %s0, 16, [#allocation4], [#allocation7]
        $region16: #{tpu_custom_call.1} parent=11 // pred_fallthru
          _
        // Predicated region
        $region17: #{tpu_custom_call.1} parent=11 // pred_check
          %p149 = pneg %p71
        $region18: #{tpu_custom_call.1} parent=11 // pred_check_branch
          %151 = sbr.rel (%p149) target = $region20
        $region19: #{tpu_custom_call.1} parent=11 // pred_region
          %s153 = ssub.s32 256, 256
          %154 = vsyncadd [#allocation5], %s153
          %s156 = sshll.u32 [#allocation8], 4
          %s157 = int_to_ptr.vmem [resolvable:$true] %s156
          %159 = dma.hbm_to_vmem [thread:$0]  %s1, 256, %s157, [#allocation5]
        $region20: #{tpu_custom_call.1} parent=11 // pred_fallthru
          _
      $region12: #{tpu_custom_call.1} parent=5 // pred_fallthru
        _
      %p160 = scmp.lt.s32.totalorder %s17, 2
      // Predicated region
      $region21: #{tpu_custom_call.1} parent=5 // pred_check
        %p161 = pneg %p160
      $region22: #{tpu_custom_call.1} parent=5 // pred_check_branch
        %163 = sbr.rel (%p161) target = $region24
      $region23: #{tpu_custom_call.1} parent=5 // pred_region
        // Predicated region
        $region25: #{tpu_custom_call.1} parent=23 // pred_check
          %p164 = pneg %p93
        $region26: #{tpu_custom_call.1} parent=23 // pred_check_branch
          %166 = sbr.rel (%p164) target = $region28
        $region27: #{tpu_custom_call.1} parent=23 // pred_region
          %s167 = sand.u32 %s83, 1
          %s168 = scalar_lea.sflag [#allocation10], %s167
          %s169 = sand.u32 %s83, 1
          %s170 = smul.addr %s169, 8
          %s171 = scalar_lea.vmem [#allocation9], %s170
          %s173 = ssub.s32 128, 128
          %174 = vsyncadd %s168, %s173
          %s175 = smul.addr %s25, 2
          %s176 = smul.addr %s24, 2
          %s177 = sadd.s32 %s175, %s176
          %s178 = smul.addr %s177, 64
          %s179 = scalar_lea.hbm %s2, %s178
          %s181 = sshll.u32 %s171, 4
          %s182 = int_to_ptr.vmem [resolvable:$true] %s181
          %184 = dma.hbm_to_vmem [thread:$0]  %s179, 128, %s182, %s168
        $region28: #{tpu_custom_call.1} parent=23 // pred_fallthru
          _
      $region24: #{tpu_custom_call.1} parent=5 // pred_fallthru
        _
      %p185 = scmp.le.s32.totalorder 1, %s17
      %p186 = scmp.lt.s32.totalorder %s17, 3
      %p187 = pnand %p185, %p186
      %p188 = pneg %p187
      // Predicated region
      $region29: #{tpu_custom_call.1} parent=5 // pred_check
        _
      $region30: #{tpu_custom_call.1} parent=5 // pred_check_branch
        %190 = sbr.rel (%p187) target = $region32
      $region31: #{tpu_custom_call.1} parent=5 // pred_region
        %s191 = ssub.s32 %s17, 1
        // Predicated region
        $region33: #{tpu_custom_call.1} parent=31 // pred_check
          %p192 = pneg %p50
        $region34: #{tpu_custom_call.1} parent=31 // pred_check_branch
          %194 = sbr.rel (%p192) target = $region36
        $region35: #{tpu_custom_call.1} parent=31 // pred_region
          %195 = dma.done [#allocation7], 16
        $region36: #{tpu_custom_call.1} parent=31 // pred_fallthru
          _
        // Predicated region
        $region37: #{tpu_custom_call.1} parent=31 // pred_check
          %p196 = pneg %p71
        $region38: #{tpu_custom_call.1} parent=31 // pred_check_branch
          %198 = sbr.rel (%p196) target = $region40
        $region39: #{tpu_custom_call.1} parent=31 // pred_region
          %199 = dma.done [#allocation5], 256
        $region40: #{tpu_custom_call.1} parent=31 // pred_fallthru
          _
        %s200 = sand.u32 %s86, 1
        %s201 = scalar_lea.sflag [#allocation10], %s200
        %s202 = sand.u32 %s86, 1
        %s203 = smul.addr %s202, 8
        %s204 = scalar_lea.vmem [#allocation9], %s203
        // Predicated region
        $region41: #{tpu_custom_call.1} parent=31 // pred_check
          %p205 = pneg %p99
        $region42: #{tpu_custom_call.1} parent=31 // pred_check_branch
          %207 = sbr.rel (%p205) target = $region44
        $region43: #{tpu_custom_call.1} parent=31 // pred_region
          %208 = dma.done %s201, 128
        $region44: #{tpu_custom_call.1} parent=31 // pred_fallthru
          _
        %209 = sfence
        %p210 = pneg %p50
        %p211 = pneg %p47
        %p212 = pneg %p71
        %p213 = pneg %p68
        %s214 = sand.u32 %s86, 1
        %s215 = scalar_lea.sflag [#allocation10], %s214
        %s216 = sand.u32 %s86, 1
        %s217 = smul.addr %s216, 8
        %s218 = scalar_lea.vmem [#allocation9], %s217
        %p219 = pneg %p99
        %p220 = pneg %p96
        %p221 = pneg %p125
        %p222 = pneg %p122
        %s223 = sand.u32 %s112, 1
        %s224 = scalar_lea.sflag [#allocation6], %s223
        %s225 = sand.u32 %s112, 1
        %s226 = smul.addr %s225, 2
        %s227 = scalar_lea.vmem [#allocation11], %s226
        %v228 = vld [vmem:[%s204] sm:$0xff]
        %v230 = vcombine.high %v228, %v228
        %vm232 = vcmask 1043456
        %v233 = vsel %vm232, %v228, 0.0
        %v234 = vrot.slane %v233, 4
        %v235 = vadd.f32 %v233, %v234
        %v236 = vrot.slane %v235, 2
        %v237 = vadd.f32 %v235, %v236
        %v238 = vrot.slane %v237, 1
        %v239 = vadd.f32 %v237, %v238
        %v240 = vsel %vm232, %v230, 0.0
        %v241 = vrot.slane %v240, 4
        %v242 = vadd.f32 %v240, %v241
        %v243 = vrot.slane %v242, 2
        %v244 = vadd.f32 %v242, %v243
        %v245 = vrot.slane %v244, 1
        %v246 = vadd.f32 %v244, %v245
        %v247 = vsel %vm232, %v228, -inf
        %v248 = vrot.slane %v247, 4
        %v249 = vmax.f32 %v247, %v248
        %v250 = vrot.slane %v249, 2
        %v251 = vmax.f32 %v249, %v250
        %v252 = vrot.slane %v251, 1
        %v253 = vmax.f32 %v251, %v252
        %v254 = vsel %vm232, %v230, -inf
        %v255 = vrot.slane %v254, 4
        %v256 = vmax.f32 %v254, %v255
        %v257 = vrot.slane %v256, 2
        %v258 = vmax.f32 %v256, %v257
        %v259 = vrot.slane %v258, 1
        %v260 = vmax.f32 %v258, %v259
        %p261 = scmp.eq.s32.totalorder %s27, 0
        // Predicated region
        $region45: #{tpu_custom_call.1} parent=31 // pred_check
          %p262 = pneg %p261
        $region46: #{tpu_custom_call.1} parent=31 // pred_check_branch
          %264 = sbr.rel (%p262) target = $region48
        $region47: #{tpu_custom_call.1} parent=31 // pred_region
          %v265 = vlaneseq
          %vm266 = vcmp.ge.s32.totalorder %v265, 0
          %vm267 = vcmp.lt.s32.totalorder %v265, 128
          %vm268 = vmand %vm266, %vm267
          %269 = vst.msk [vmem:[#allocation2] sm:$0x1] %vm268, 0.0
          %270 = vst.msk [vmem:[#allocation2 + $0x3] sm:$0x1] %vm268, 0.0
          %271 = vst.msk [vmem:[#allocation3] sm:$0x1] %vm268, 0.0
          %272 = vst.msk [vmem:[#allocation3 + $0x3] sm:$0x1] %vm268, 0.0
          %v275 = vcombine.low %v239, %v246
          %v277 = vunpack.c.l.s4 1966171168
          %v278 = vunpack.c.0.s8 %v277
          %v279 = vlaneseq
          %v280 = vshrl.u32 %v279, 7
          %v281 = vsub.s32 %v278, %v280
          %v282 = vrot.slane %v275, %v281
          %v284 = vunpack.c.l.s4 1966171168
          %v285 = vunpack.c.0.s8 %v284
          %v286 = vlaneseq
          %v287 = vshrl.u32 %v286, 7
          %v288 = vsub.s32 %v285, %v287
          %v289 = vrot.slane %v282, %v288
          %vm291 = vcmp.lt.s32.totalorder %v265, 256
          %vm292 = vmand %vm266, %vm291
          %293 = vst.msk [vmem:[#allocation2 + $0x1] sm:$0x3] %vm292, %v289
          %v296 = vcombine.low %v253, %v260
          %v298 = vunpack.c.l.s4 1966171168
          %v299 = vunpack.c.0.s8 %v298
          %v300 = vlaneseq
          %v301 = vshrl.u32 %v300, 7
          %v302 = vsub.s32 %v299, %v301
          %v303 = vrot.slane %v296, %v302
          %v305 = vunpack.c.l.s4 1966171168
          %v306 = vunpack.c.0.s8 %v305
          %v307 = vlaneseq
          %v308 = vshrl.u32 %v307, 7
          %v309 = vsub.s32 %v306, %v308
          %v310 = vrot.slane %v303, %v309
          %312 = vst.msk [vmem:[#allocation3 + $0x1] sm:$0x3] %vm292, %v310
        $region48: #{tpu_custom_call.1} parent=31 // pred_fallthru
          _
        %p313 = scmp.gt.s32.totalorder %s27, 0
        // Predicated region
        $region49: #{tpu_custom_call.1} parent=31 // pred_check
          %p314 = pneg %p313
        $region50: #{tpu_custom_call.1} parent=31 // pred_check_branch
          %316 = sbr.rel (%p314) target = $region52
        $region51: #{tpu_custom_call.1} parent=31 // pred_region
          %v317 = vld [vmem:[#allocation2 + $0x1] sm:$0x3]
          %v320 = vcombine.low %v239, %v246
          %v322 = vunpack.c.l.s4 1966171168
          %v323 = vunpack.c.0.s8 %v322
          %v324 = vlaneseq
          %v325 = vshrl.u32 %v324, 7
          %v326 = vsub.s32 %v323, %v325
          %v327 = vrot.slane %v320, %v326
          %v329 = vunpack.c.l.s4 1966171168
          %v330 = vunpack.c.0.s8 %v329
          %v331 = vlaneseq
          %v332 = vshrl.u32 %v331, 7
          %v333 = vsub.s32 %v330, %v332
          %v334 = vrot.slane %v327, %v333
          %v336 = vadd.f32 %v317, %v334
          %v337 = vlaneseq
          %vm338 = vcmp.ge.s32.totalorder %v337, 0
          %vm339 = vcmp.lt.s32.totalorder %v337, 256
          %vm340 = vmand %vm338, %vm339
          %341 = vst.msk [vmem:[#allocation2 + $0x1] sm:$0x3] %vm340, %v336
          %v342 = vld [vmem:[#allocation3 + $0x1] sm:$0x3]
          %v345 = vcombine.low %v253, %v260
          %v347 = vunpack.c.l.s4 1966171168
          %v348 = vunpack.c.0.s8 %v347
          %v349 = vlaneseq
          %v350 = vshrl.u32 %v349, 7
          %v351 = vsub.s32 %v348, %v350
          %v352 = vrot.slane %v345, %v351
          %v354 = vunpack.c.l.s4 1966171168
          %v355 = vunpack.c.0.s8 %v354
          %v356 = vlaneseq
          %v357 = vshrl.u32 %v356, 7
          %v358 = vsub.s32 %v355, %v357
          %v359 = vrot.slane %v352, %v358
          %v361 = vmax.f32 %v342, %v359
          %362 = vst.msk [vmem:[#allocation3 + $0x1] sm:$0x3] %vm340, %v361
        $region52: #{tpu_custom_call.1} parent=31 // pred_fallthru
          _
        // Predicated region
        $region53: #{tpu_custom_call.1} parent=31 // pred_check
          %p363 = pneg %p261
        $region54: #{tpu_custom_call.1} parent=31 // pred_check_branch
          %365 = sbr.rel (%p363) target = $region56
        $region55: #{tpu_custom_call.1} parent=31 // pred_region
          %s366 = sld [smem:[#allocation4]]
          %s367 = sld [smem:[#allocation4 + $0x1]]
          %s368 = sld [smem:[#allocation4 + $0x2]]
          %s369 = sld [smem:[#allocation4 + $0x3]]
          %s370 = sld [smem:[#allocation4 + $0x4]]
          %s371 = sld [smem:[#allocation4 + $0x5]]
          %s372 = sld [smem:[#allocation4 + $0x6]]
          %s373 = sld [smem:[#allocation4 + $0x7]]
          %s374 = sld [smem:[#allocation4 + $0x8]]
          %s375 = sld [smem:[#allocation4 + $0x9]]
          %s376 = sld [smem:[#allocation4 + $0xa]]
          %s377 = sld [smem:[#allocation4 + $0xb]]
          %s378 = sld [smem:[#allocation4 + $0xc]]
          %s379 = sld [smem:[#allocation4 + $0xd]]
          %s380 = sld [smem:[#allocation4 + $0xe]]
          %s381 = sld [smem:[#allocation4 + $0xf]]
          %s382 = sld [smem:[#allocation4 + $0x10]]
          %s383 = sld [smem:[#allocation4 + $0x11]]
          %s384 = sld [smem:[#allocation4 + $0x12]]
          %s385 = sld [smem:[#allocation4 + $0x13]]
          %s386 = sld [smem:[#allocation4 + $0x14]]
          %s387 = sld [smem:[#allocation4 + $0x15]]
          %s388 = sld [smem:[#allocation4 + $0x16]]
          %s389 = sld [smem:[#allocation4 + $0x17]]
          %s390 = sld [smem:[#allocation4 + $0x18]]
          %s391 = sld [smem:[#allocation4 + $0x19]]
          %s392 = sld [smem:[#allocation4 + $0x1a]]
          %s393 = sld [smem:[#allocation4 + $0x1b]]
          %s394 = sld [smem:[#allocation4 + $0x1c]]
          %s395 = sld [smem:[#allocation4 + $0x1d]]
          %s396 = sld [smem:[#allocation4 + $0x1e]]
          %s397 = sld [smem:[#allocation4 + $0x1f]]
          %s398 = sld [smem:[#allocation4 + $0x20]]
          %s399 = sld [smem:[#allocation4 + $0x21]]
          %s400 = sld [smem:[#allocation4 + $0x22]]
          %s401 = sld [smem:[#allocation4 + $0x23]]
          %s402 = sld [smem:[#allocation4 + $0x24]]
          %s403 = sld [smem:[#allocation4 + $0x25]]
          %s404 = sld [smem:[#allocation4 + $0x26]]
          %s405 = sld [smem:[#allocation4 + $0x27]]
          %s406 = sld [smem:[#allocation4 + $0x28]]
          %s407 = sld [smem:[#allocation4 + $0x29]]
          %s408 = sld [smem:[#allocation4 + $0x2a]]
          %s409 = sld [smem:[#allocation4 + $0x2b]]
          %s410 = sld [smem:[#allocation4 + $0x2c]]
          %s411 = sld [smem:[#allocation4 + $0x2d]]
          %s412 = sld [smem:[#allocation4 + $0x2e]]
          %s413 = sld [smem:[#allocation4 + $0x2f]]
          %s414 = sld [smem:[#allocation4 + $0x30]]
          %s415 = sld [smem:[#allocation4 + $0x31]]
          %s416 = sld [smem:[#allocation4 + $0x32]]
          %s417 = sld [smem:[#allocation4 + $0x33]]
          %s418 = sld [smem:[#allocation4 + $0x34]]
          %s419 = sld [smem:[#allocation4 + $0x35]]
          %s420 = sld [smem:[#allocation4 + $0x36]]
          %s421 = sld [smem:[#allocation4 + $0x37]]
          %s422 = sld [smem:[#allocation4 + $0x38]]
          %s423 = sld [smem:[#allocation4 + $0x39]]
          %s424 = sld [smem:[#allocation4 + $0x3a]]
          %s425 = sld [smem:[#allocation4 + $0x3b]]
          %s426 = sld [smem:[#allocation4 + $0x3c]]
          %s427 = sld [smem:[#allocation4 + $0x3d]]
          %s428 = sld [smem:[#allocation4 + $0x3e]]
          %s429 = sld [smem:[#allocation4 + $0x3f]]
          %s430 = sld [smem:[#allocation4 + $0x40]]
          %s431 = sld [smem:[#allocation4 + $0x41]]
          %s432 = sld [smem:[#allocation4 + $0x42]]
          %s433 = sld [smem:[#allocation4 + $0x43]]
          %s434 = sld [smem:[#allocation4 + $0x44]]
          %s435 = sld [smem:[#allocation4 + $0x45]]
          %s436 = sld [smem:[#allocation4 + $0x46]]
          %s437 = sld [smem:[#allocation4 + $0x47]]
          %s438 = sld [smem:[#allocation4 + $0x48]]
          %s439 = sld [smem:[#allocation4 + $0x49]]
          %s440 = sld [smem:[#allocation4 + $0x4a]]
          %s441 = sld [smem:[#allocation4 + $0x4b]]
          %s442 = sld [smem:[#allocation4 + $0x4c]]
          %s443 = sld [smem:[#allocation4 + $0x4d]]
          %s444 = sld [smem:[#allocation4 + $0x4e]]
          %s445 = sld [smem:[#allocation4 + $0x4f]]
          %s446 = sld [smem:[#allocation4 + $0x50]]
          %s447 = sld [smem:[#allocation4 + $0x51]]
          %s448 = sld [smem:[#allocation4 + $0x52]]
          %s449 = sld [smem:[#allocation4 + $0x53]]
          %s450 = sld [smem:[#allocation4 + $0x54]]
          %s451 = sld [smem:[#allocation4 + $0x55]]
          %s452 = sld [smem:[#allocation4 + $0x56]]
          %s453 = sld [smem:[#allocation4 + $0x57]]
          %s454 = sld [smem:[#allocation4 + $0x58]]
          %s455 = sld [smem:[#allocation4 + $0x59]]
          %s456 = sld [smem:[#allocation4 + $0x5a]]
          %s457 = sld [smem:[#allocation4 + $0x5b]]
          %s458 = sld [smem:[#allocation4 + $0x5c]]
          %s459 = sld [smem:[#allocation4 + $0x5d]]
          %s460 = sld [smem:[#allocation4 + $0x5e]]
          %s461 = sld [smem:[#allocation4 + $0x5f]]
          %s462 = sld [smem:[#allocation4 + $0x60]]
          %s463 = sld [smem:[#allocation4 + $0x61]]
          %v464 = vld [vmem:[#allocation8] ss:$8 sm:$0x3]
          %s465 = scalar_lea.vmem [#allocation8], 1
          %v466 = vld [vmem:[%s465] ss:$8 sm:$0x3]
          %s467 = scalar_lea.vmem [#allocation8], 2
          %v468 = vld [vmem:[%s467] ss:$8 sm:$0x3]
          %s469 = scalar_lea.vmem [#allocation8], 4
          %v470 = vld [vmem:[%s469] ss:$8 sm:$0x3]
          %s471 = scalar_lea.vmem [#allocation8], 5
          %v472 = vld [vmem:[%s471] ss:$8 sm:$0x3]
          %s473 = scalar_lea.vmem [#allocation8], 6
          %v474 = vld [vmem:[%s473] ss:$8 sm:$0x3]
          %v475 = vld [vmem:[#allocation2] sm:$0x7]
          %v476 = vstv %s366
          %v477 = vmul.f32 %v476, %v475
          %v478 = vadd.f32 %v477, 0.0
          %v479 = vld [vmem:[#allocation3] sm:$0x7]
          %v480 = vstv %s415
          %v481 = vmul.f32 %v480, %v479
          %v482 = vadd.f32 %v481, 0.0
          %v483 = vstv %s373
          %v484 = vmul.f32 %v483, %v475
          %486 = vrot.lane.b32.xlu0 %v484, 112
          %v487 = vpop.permute.xlu0 %486
          %v488 = vrot.slane %v487, 1
          %vm489 = vcmask 916480
          %v490 = vsel %vm489, %v487, %v488
          %v492 = vadd.f32 %v478, %v490
          %v493 = vstv %s422
          %v494 = vmul.f32 %v493, %v479
          %496 = vrot.lane.b32.xlu0 %v494, 112
          %v497 = vpop.permute.xlu0 %496
          %v498 = vrot.slane %v497, 1
          %v499 = vsel %vm489, %v497, %v498
          %v501 = vadd.f32 %v482, %v499
          %v502 = vstv %s380
          %v503 = vmul.f32 %v502, %v475
          %505 = vrot.lane.b32.xlu0 %v503, 96
          %v506 = vpop.permute.xlu0 %505
          %v507 = vrot.slane %v506, 1
          %vm508 = vcmask 785408
          %v509 = vsel %vm508, %v506, %v507
          %v511 = vadd.f32 %v492, %v509
          %v512 = vstv %s429
          %v513 = vmul.f32 %v512, %v479
          %515 = vrot.lane.b32.xlu0 %v513, 96
          %v516 = vpop.permute.xlu0 %515
          %v517 = vrot.slane %v516, 1
          %v518 = vsel %vm508, %v516, %v517
          %v520 = vadd.f32 %v501, %v518
          %v521 = vstv %s387
          %v522 = vmul.f32 %v521, %v475
          %524 = vrot.lane.b32.xlu0 %v522, 80
          %v525 = vpop.permute.xlu0 %524
          %v526 = vrot.slane %v525, 1
          %vm527 = vcmask 654336
          %v528 = vsel %vm527, %v525, %v526
          %v530 = vadd.f32 %v511, %v528
          %v531 = vstv %s436
          %v532 = vmul.f32 %v531, %v479
          %534 = vrot.lane.b32.xlu0 %v532, 80
          %v535 = vpop.permute.xlu0 %534
          %v536 = vrot.slane %v535, 1
          %v537 = vsel %vm527, %v535, %v536
          %v539 = vadd.f32 %v520, %v537
          %v540 = vld [vmem:[#allocation2 + $0x1] sm:$0x7]
          %v541 = vstv %s394
          %v542 = vmul.f32 %v541, %v540
          %544 = vrot.lane.b32.xlu0 %v542, 64
          %v545 = vpop.permute.xlu0 %544
          %v546 = vrot.slane %v545, 7
          %vm547 = vcmask 523264
          %v548 = vsel %vm547, %v546, %v545
          %v550 = vadd.f32 %v530, %v548
          %v551 = vld [vmem:[#allocation3 + $0x1] sm:$0x7]
          %v552 = vstv %s443
          %v553 = vmul.f32 %v552, %v551
          %555 = vrot.lane.b32.xlu0 %v553, 64
          %v556 = vpop.permute.xlu0 %555
          %v557 = vrot.slane %v556, 7
          %v558 = vsel %vm547, %v557, %v556
          %v560 = vadd.f32 %v539, %v558
          %v561 = vstv %s401
          %v562 = vmul.f32 %v561, %v540
          %564 = vrot.lane.b32.xlu0 %v562, 48
          %v565 = vpop.permute.xlu0 %564
          %v566 = vrot.slane %v565, 7
          %vm567 = vcmask 392192
          %v568 = vsel %vm567, %v566, %v565
          %v570 = vadd.f32 %v550, %v568
          %v571 = vstv %s450
          %v572 = vmul.f32 %v571, %v551
          %574 = vrot.lane.b32.xlu0 %v572, 48
          %v575 = vpop.permute.xlu0 %574
          %v576 = vrot.slane %v575, 7
          %v577 = vsel %vm567, %v576, %v575
          %v579 = vadd.f32 %v560, %v577
          %v580 = vstv %s408
          %v581 = vmul.f32 %v580, %v540
          %583 = vrot.lane.b32.xlu0 %v581, 32
          %v584 = vpop.permute.xlu0 %583
          %v585 = vrot.slane %v584, 7
          %vm586 = vcmask 261120
          %v587 = vsel %vm586, %v585, %v584
          %v589 = vadd.f32 %v570, %v587
          %v590 = vstv %s457
          %v591 = vmul.f32 %v590, %v551
          %593 = vrot.lane.b32.xlu0 %v591, 32
          %v594 = vpop.permute.xlu0 %593
          %v595 = vrot.slane %v594, 7
          %v596 = vsel %vm586, %v595, %v594
          %v598 = vadd.f32 %v579, %v596
          %v599 = vadd.f32 %v589, %v598
          %601 = vrot.lane.b32.xlu0 %v464, 77
          %v602 = vpop.permute.xlu0 %601
          %v603 = vrot.slane %v602, 7
          %vm604 = vcmask 629760
          %v605 = vsel %vm604, %v603, %v602
          %v607 = vmul.f32 %v599, %v605
          %v608 = vadd.f32 %v607, 0.0
          %v609 = vstv %s367
          %v610 = vmul.f32 %v609, %v475
          %v611 = vadd.f32 %v610, 0.0
          %v612 = vstv %s416
          %v613 = vmul.f32 %v612, %v479
          %v614 = vadd.f32 %v613, 0.0
          %v615 = vstv %s374
          %v616 = vmul.f32 %v615, %v475
          %618 = vrot.lane.b32.xlu0 %v616, 112
          %v619 = vpop.permute.xlu0 %618
          %v620 = vrot.slane %v619, 1
          %v621 = vsel %vm489, %v619, %v620
          %v623 = vadd.f32 %v611, %v621
          %v624 = vstv %s423
          %v625 = vmul.f32 %v624, %v479
          %627 = vrot.lane.b32.xlu0 %v625, 112
          %v628 = vpop.permute.xlu0 %627
          %v629 = vrot.slane %v628, 1
          %v630 = vsel %vm489, %v628, %v629
          %v632 = vadd.f32 %v614, %v630
          %v633 = vstv %s381
          %v634 = vmul.f32 %v633, %v475
          %636 = vrot.lane.b32.xlu0 %v634, 96
          %v637 = vpop.permute.xlu0 %636
          %v638 = vrot.slane %v637, 1
          %v639 = vsel %vm508, %v637, %v638
          %v641 = vadd.f32 %v623, %v639
          %v642 = vstv %s430
          %v643 = vmul.f32 %v642, %v479
          %645 = vrot.lane.b32.xlu0 %v643, 96
          %v646 = vpop.permute.xlu0 %645
          %v647 = vrot.slane %v646, 1
          %v648 = vsel %vm508, %v646, %v647
          %v650 = vadd.f32 %v632, %v648
          %v651 = vstv %s388
          %v652 = vmul.f32 %v651, %v475
          %654 = vrot.lane.b32.xlu0 %v652, 80
          %v655 = vpop.permute.xlu0 %654
          %v656 = vrot.slane %v655, 1
          %v657 = vsel %vm527, %v655, %v656
          %v659 = vadd.f32 %v641, %v657
          %v660 = vstv %s437
          %v661 = vmul.f32 %v660, %v479
          %663 = vrot.lane.b32.xlu0 %v661, 80
          %v664 = vpop.permute.xlu0 %663
          %v665 = vrot.slane %v664, 1
          %v666 = vsel %vm527, %v664, %v665
          %v668 = vadd.f32 %v650, %v666
          %v669 = vstv %s395
          %v670 = vmul.f32 %v669, %v540
          %672 = vrot.lane.b32.xlu0 %v670, 64
          %v673 = vpop.permute.xlu0 %672
          %v674 = vrot.slane %v673, 7
          %v675 = vsel %vm547, %v674, %v673
          %v677 = vadd.f32 %v659, %v675
          %v678 = vstv %s444
          %v679 = vmul.f32 %v678, %v551
          %681 = vrot.lane.b32.xlu0 %v679, 64
          %v682 = vpop.permute.xlu0 %681
          %v683 = vrot.slane %v682, 7
          %v684 = vsel %vm547, %v683, %v682
          %v686 = vadd.f32 %v668, %v684
          %v687 = vstv %s402
          %v688 = vmul.f32 %v687, %v540
          %690 = vrot.lane.b32.xlu0 %v688, 48
          %v691 = vpop.permute.xlu0 %690
          %v692 = vrot.slane %v691, 7
          %v693 = vsel %vm567, %v692, %v691
          %v695 = vadd.f32 %v677, %v693
          %v696 = vstv %s451
          %v697 = vmul.f32 %v696, %v551
          %699 = vrot.lane.b32.xlu0 %v697, 48
          %v700 = vpop.permute.xlu0 %699
          %v701 = vrot.slane %v700, 7
          %v702 = vsel %vm567, %v701, %v700
          %v704 = vadd.f32 %v686, %v702
          %v705 = vstv %s409
          %v706 = vmul.f32 %v705, %v540
          %708 = vrot.lane.b32.xlu0 %v706, 32
          %v709 = vpop.permute.xlu0 %708
          %v710 = vrot.slane %v709, 7
          %v711 = vsel %vm586, %v710, %v709
          %v713 = vadd.f32 %v695, %v711
          %v714 = vstv %s458
          %v715 = vmul.f32 %v714, %v551
          %717 = vrot.lane.b32.xlu0 %v715, 32
          %v718 = vpop.permute.xlu0 %717
          %v719 = vrot.slane %v718, 7
          %v720 = vsel %vm586, %v719, %v718
          %v722 = vadd.f32 %v704, %v720
          %v723 = vadd.f32 %v713, %v722
          %725 = vrot.lane.b32.xlu0 %v466, 78
          %v726 = vpop.permute.xlu0 %725
          %v727 = vrot.slane %v726, 7
          %vm728 = vcmask 637952
          %v729 = vsel %vm728, %v727, %v726
          %v731 = vmul.f32 %v723, %v729
          %733 = vrot.lane.b32.xlu0 %v731, 127
          %v734 = vpop.permute.xlu0 %733
          %v735 = vrot.slane %v734, 1
          %vm736 = vcmask 1039360
          %v737 = vsel %vm736, %v734, %v735
          %v739 = vadd.f32 %v608, %v737
          %v740 = vstv %s368
          %v741 = vmul.f32 %v740, %v475
          %v742 = vadd.f32 %v741, 0.0
          %v743 = vstv %s417
          %v744 = vmul.f32 %v743, %v479
          %v745 = vadd.f32 %v744, 0.0
          %v746 = vstv %s375
          %v747 = vmul.f32 %v746, %v475
          %749 = vrot.lane.b32.xlu0 %v747, 112
          %v750 = vpop.permute.xlu0 %749
          %v751 = vrot.slane %v750, 1
          %v752 = vsel %vm489, %v750, %v751
          %v754 = vadd.f32 %v742, %v752
          %v755 = vstv %s424
          %v756 = vmul.f32 %v755, %v479
          %758 = vrot.lane.b32.xlu0 %v756, 112
          %v759 = vpop.permute.xlu0 %758
          %v760 = vrot.slane %v759, 1
          %v761 = vsel %vm489, %v759, %v760
          %v763 = vadd.f32 %v745, %v761
          %v764 = vstv %s382
          %v765 = vmul.f32 %v764, %v475
          %767 = vrot.lane.b32.xlu0 %v765, 96
          %v768 = vpop.permute.xlu0 %767
          %v769 = vrot.slane %v768, 1
          %v770 = vsel %vm508, %v768, %v769
          %v772 = vadd.f32 %v754, %v770
          %v773 = vstv %s431
          %v774 = vmul.f32 %v773, %v479
          %776 = vrot.lane.b32.xlu0 %v774, 96
          %v777 = vpop.permute.xlu0 %776
          %v778 = vrot.slane %v777, 1
          %v779 = vsel %vm508, %v777, %v778
          %v781 = vadd.f32 %v763, %v779
          %v782 = vstv %s389
          %v783 = vmul.f32 %v782, %v475
          %785 = vrot.lane.b32.xlu0 %v783, 80
          %v786 = vpop.permute.xlu0 %785
          %v787 = vrot.slane %v786, 1
          %v788 = vsel %vm527, %v786, %v787
          %v790 = vadd.f32 %v772, %v788
          %v791 = vstv %s438
          %v792 = vmul.f32 %v791, %v479
          %794 = vrot.lane.b32.xlu0 %v792, 80
          %v795 = vpop.permute.xlu0 %794
          %v796 = vrot.slane %v795, 1
          %v797 = vsel %vm527, %v795, %v796
          %v799 = vadd.f32 %v781, %v797
          %v800 = vstv %s396
          %v801 = vmul.f32 %v800, %v540
          %803 = vrot.lane.b32.xlu0 %v801, 64
          %v804 = vpop.permute.xlu0 %803
          %v805 = vrot.slane %v804, 7
          %v806 = vsel %vm547, %v805, %v804
          %v808 = vadd.f32 %v790, %v806
          %v809 = vstv %s445
          %v810 = vmul.f32 %v809, %v551
          %812 = vrot.lane.b32.xlu0 %v810, 64
          %v813 = vpop.permute.xlu0 %812
          %v814 = vrot.slane %v813, 7
          %v815 = vsel %vm547, %v814, %v813
          %v817 = vadd.f32 %v799, %v815
          %v818 = vstv %s403
          %v819 = vmul.f32 %v818, %v540
          %821 = vrot.lane.b32.xlu0 %v819, 48
          %v822 = vpop.permute.xlu0 %821
          %v823 = vrot.slane %v822, 7
          %v824 = vsel %vm567, %v823, %v822
          %v826 = vadd.f32 %v808, %v824
          %v827 = vstv %s452
          %v828 = vmul.f32 %v827, %v551
          %830 = vrot.lane.b32.xlu0 %v828, 48
          %v831 = vpop.permute.xlu0 %830
          %v832 = vrot.slane %v831, 7
          %v833 = vsel %vm567, %v832, %v831
          %v835 = vadd.f32 %v817, %v833
          %v836 = vstv %s410
          %v837 = vmul.f32 %v836, %v540
          %839 = vrot.lane.b32.xlu0 %v837, 32
          %v840 = vpop.permute.xlu0 %839
          %v841 = vrot.slane %v840, 7
          %v842 = vsel %vm586, %v841, %v840
          %v844 = vadd.f32 %v826, %v842
          %v845 = vstv %s459
          %v846 = vmul.f32 %v845, %v551
          %848 = vrot.lane.b32.xlu0 %v846, 32
          %v849 = vpop.permute.xlu0 %848
          %v850 = vrot.slane %v849, 7
          %v851 = vsel %vm586, %v850, %v849
          %v853 = vadd.f32 %v835, %v851
          %v854 = vadd.f32 %v844, %v853
          %856 = vrot.lane.b32.xlu0 %v468, 79
          %v857 = vpop.permute.xlu0 %856
          %v858 = vrot.slane %v857, 7
          %vm859 = vcmask 646144
          %v860 = vsel %vm859, %v858, %v857
          %v862 = vmul.f32 %v854, %v860
          %864 = vrot.lane.b32.xlu0 %v862, 126
          %v865 = vpop.permute.xlu0 %864
          %v866 = vrot.slane %v865, 1
          %vm867 = vcmask 1031168
          %v868 = vsel %vm867, %v865, %v866
          %v870 = vadd.f32 %v739, %v868
          %v871 = vstv %s369
          %v872 = vmul.f32 %v871, %v475
          %v873 = vadd.f32 %v872, 0.0
          %v874 = vstv %s418
          %v875 = vmul.f32 %v874, %v479
          %v876 = vadd.f32 %v875, 0.0
          %v877 = vstv %s376
          %v878 = vmul.f32 %v877, %v475
          %880 = vrot.lane.b32.xlu0 %v878, 112
          %v881 = vpop.permute.xlu0 %880
          %v882 = vrot.slane %v881, 1
          %v883 = vsel %vm489, %v881, %v882
          %v885 = vadd.f32 %v873, %v883
          %v886 = vstv %s425
          %v887 = vmul.f32 %v886, %v479
          %889 = vrot.lane.b32.xlu0 %v887, 112
          %v890 = vpop.permute.xlu0 %889
          %v891 = vrot.slane %v890, 1
          %v892 = vsel %vm489, %v890, %v891
          %v894 = vadd.f32 %v876, %v892
          %v895 = vstv %s383
          %v896 = vmul.f32 %v895, %v475
          %898 = vrot.lane.b32.xlu0 %v896, 96
          %v899 = vpop.permute.xlu0 %898
          %v900 = vrot.slane %v899, 1
          %v901 = vsel %vm508, %v899, %v900
          %v903 = vadd.f32 %v885, %v901
          %v904 = vstv %s432
          %v905 = vmul.f32 %v904, %v479
          %907 = vrot.lane.b32.xlu0 %v905, 96
          %v908 = vpop.permute.xlu0 %907
          %v909 = vrot.slane %v908, 1
          %v910 = vsel %vm508, %v908, %v909
          %v912 = vadd.f32 %v894, %v910
          %v913 = vld [vmem:[#allocation2 + $0x1] sm:$0x3]
          %v914 = vstv %s390
          %v915 = vmul.f32 %v914, %v913
          %917 = vrot.lane.b32.xlu0 %v915, 80
          %v918 = vpop.permute.xlu0 %917
          %v919 = vrot.slane %v918, 7
          %v920 = vsel %vm527, %v919, %v918
          %v922 = vadd.f32 %v903, %v920
          %v923 = vld [vmem:[#allocation3 + $0x1] sm:$0x3]
          %v924 = vstv %s439
          %v925 = vmul.f32 %v924, %v923
          %927 = vrot.lane.b32.xlu0 %v925, 80
          %v928 = vpop.permute.xlu0 %927
          %v929 = vrot.slane %v928, 7
          %v930 = vsel %vm527, %v929, %v928
          %v932 = vadd.f32 %v912, %v930
          %v933 = vstv %s397
          %v934 = vmul.f32 %v933, %v540
          %936 = vrot.lane.b32.xlu0 %v934, 64
          %v937 = vpop.permute.xlu0 %936
          %v938 = vrot.slane %v937, 7
          %v939 = vsel %vm547, %v938, %v937
          %v941 = vadd.f32 %v922, %v939
          %v942 = vstv %s446
          %v943 = vmul.f32 %v942, %v551
          %945 = vrot.lane.b32.xlu0 %v943, 64
          %v946 = vpop.permute.xlu0 %945
          %v947 = vrot.slane %v946, 7
          %v948 = vsel %vm547, %v947, %v946
          %v950 = vadd.f32 %v932, %v948
          %v951 = vstv %s404
          %v952 = vmul.f32 %v951, %v540
          %954 = vrot.lane.b32.xlu0 %v952, 48
          %v955 = vpop.permute.xlu0 %954
          %v956 = vrot.slane %v955, 7
          %v957 = vsel %vm567, %v956, %v955
          %v959 = vadd.f32 %v941, %v957
          %v960 = vstv %s453
          %v961 = vmul.f32 %v960, %v551
          %963 = vrot.lane.b32.xlu0 %v961, 48
          %v964 = vpop.permute.xlu0 %963
          %v965 = vrot.slane %v964, 7
          %v966 = vsel %vm567, %v965, %v964
          %v968 = vadd.f32 %v950, %v966
          %v969 = vstv %s411
          %v970 = vmul.f32 %v969, %v540
          %972 = vrot.lane.b32.xlu0 %v970, 32
          %v973 = vpop.permute.xlu0 %972
          %v974 = vrot.slane %v973, 7
          %v975 = vsel %vm586, %v974, %v973
          %v977 = vadd.f32 %v959, %v975
          %v978 = vstv %s460
          %v979 = vmul.f32 %v978, %v551
          %981 = vrot.lane.b32.xlu0 %v979, 32
          %v982 = vpop.permute.xlu0 %981
          %v983 = vrot.slane %v982, 7
          %v984 = vsel %vm586, %v983, %v982
          %v986 = vadd.f32 %v968, %v984
          %v987 = vadd.f32 %v977, %v986
          %989 = vrot.lane.b32.xlu0 %v987, 125
          %v990 = vpop.permute.xlu0 %989
          %v991 = vrot.slane %v990, 1
          %vm992 = vcmask 1022976
          %v993 = vsel %vm992, %v990, %v991
          %v995 = vadd.f32 %v870, %v993
          %v996 = vstv %s370
          %v997 = vmul.f32 %v996, %v475
          %v998 = vadd.f32 %v997, 0.0
          %v999 = vstv %s419
          %v1000 = vmul.f32 %v999, %v479
          %v1001 = vadd.f32 %v1000, 0.0
          %v1002 = vstv %s377
          %v1003 = vmul.f32 %v1002, %v475
          %1005 = vrot.lane.b32.xlu0 %v1003, 112
          %v1006 = vpop.permute.xlu0 %1005
          %v1007 = vrot.slane %v1006, 1
          %v1008 = vsel %vm489, %v1006, %v1007
          %v1010 = vadd.f32 %v998, %v1008
          %v1011 = vstv %s426
          %v1012 = vmul.f32 %v1011, %v479
          %1014 = vrot.lane.b32.xlu0 %v1012, 112
          %v1015 = vpop.permute.xlu0 %1014
          %v1016 = vrot.slane %v1015, 1
          %v1017 = vsel %vm489, %v1015, %v1016
          %v1019 = vadd.f32 %v1001, %v1017
          %v1020 = vstv %s384
          %v1021 = vmul.f32 %v1020, %v475
          %1023 = vrot.lane.b32.xlu0 %v1021, 96
          %v1024 = vpop.permute.xlu0 %1023
          %v1025 = vrot.slane %v1024, 1
          %v1026 = vsel %vm508, %v1024, %v1025
          %v1028 = vadd.f32 %v1010, %v1026
          %v1029 = vstv %s433
          %v1030 = vmul.f32 %v1029, %v479
          %1032 = vrot.lane.b32.xlu0 %v1030, 96
          %v1033 = vpop.permute.xlu0 %1032
          %v1034 = vrot.slane %v1033, 1
          %v1035 = vsel %vm508, %v1033, %v1034
          %v1037 = vadd.f32 %v1019, %v1035
          %v1038 = vstv %s391
          %v1039 = vmul.f32 %v1038, %v540
          %1041 = vrot.lane.b32.xlu0 %v1039, 80
          %v1042 = vpop.permute.xlu0 %1041
          %v1043 = vrot.slane %v1042, 7
          %v1044 = vsel %vm527, %v1043, %v1042
          %v1046 = vadd.f32 %v1028, %v1044
          %v1047 = vstv %s440
          %v1048 = vmul.f32 %v1047, %v551
          %1050 = vrot.lane.b32.xlu0 %v1048, 80
          %v1051 = vpop.permute.xlu0 %1050
          %v1052 = vrot.slane %v1051, 7
          %v1053 = vsel %vm527, %v1052, %v1051
          %v1055 = vadd.f32 %v1037, %v1053
          %v1056 = vstv %s398
          %v1057 = vmul.f32 %v1056, %v540
          %1059 = vrot.lane.b32.xlu0 %v1057, 64
          %v1060 = vpop.permute.xlu0 %1059
          %v1061 = vrot.slane %v1060, 7
          %v1062 = vsel %vm547, %v1061, %v1060
          %v1064 = vadd.f32 %v1046, %v1062
          %v1065 = vstv %s447
          %v1066 = vmul.f32 %v1065, %v551
          %1068 = vrot.lane.b32.xlu0 %v1066, 64
          %v1069 = vpop.permute.xlu0 %1068
          %v1070 = vrot.slane %v1069, 7
          %v1071 = vsel %vm547, %v1070, %v1069
          %v1073 = vadd.f32 %v1055, %v1071
          %v1074 = vstv %s405
          %v1075 = vmul.f32 %v1074, %v540
          %1077 = vrot.lane.b32.xlu0 %v1075, 48
          %v1078 = vpop.permute.xlu0 %1077
          %v1079 = vrot.slane %v1078, 7
          %v1080 = vsel %vm567, %v1079, %v1078
          %v1082 = vadd.f32 %v1064, %v1080
          %v1083 = vstv %s454
          %v1084 = vmul.f32 %v1083, %v551
          %1086 = vrot.lane.b32.xlu0 %v1084, 48
          %v1087 = vpop.permute.xlu0 %1086
          %v1088 = vrot.slane %v1087, 7
          %v1089 = vsel %vm567, %v1088, %v1087
          %v1091 = vadd.f32 %v1073, %v1089
          %v1092 = vstv %s412
          %v1093 = vmul.f32 %v1092, %v540
          %1095 = vrot.lane.b32.xlu0 %v1093, 32
          %v1096 = vpop.permute.xlu0 %1095
          %v1097 = vrot.slane %v1096, 7
          %v1098 = vsel %vm586, %v1097, %v1096
          %v1100 = vadd.f32 %v1082, %v1098
          %v1101 = vstv %s461
          %v1102 = vmul.f32 %v1101, %v551
          %1104 = vrot.lane.b32.xlu0 %v1102, 32
          %v1105 = vpop.permute.xlu0 %1104
          %v1106 = vrot.slane %v1105, 7
          %v1107 = vsel %vm586, %v1106, %v1105
          %v1109 = vadd.f32 %v1091, %v1107
          %v1110 = vadd.f32 %v1100, %v1109
          %1112 = vrot.lane.b32.xlu0 %v470, 81
          %v1113 = vpop.permute.xlu0 %1112
          %v1114 = vrot.slane %v1113, 7
          %vm1115 = vcmask 662528
          %v1116 = vsel %vm1115, %v1114, %v1113
          %v1118 = vmul.f32 %v1110, %v1116
          %1120 = vrot.lane.b32.xlu0 %v1118, 124
          %v1121 = vpop.permute.xlu0 %1120
          %v1122 = vrot.slane %v1121, 1
          %vm1123 = vcmask 1014784
          %v1124 = vsel %vm1123, %v1121, %v1122
          %v1126 = vadd.f32 %v995, %v1124
          %v1127 = vstv %s371
          %v1128 = vmul.f32 %v1127, %v475
          %v1129 = vadd.f32 %v1128, 0.0
          %v1130 = vstv %s420
          %v1131 = vmul.f32 %v1130, %v479
          %v1132 = vadd.f32 %v1131, 0.0
          %v1133 = vstv %s378
          %v1134 = vmul.f32 %v1133, %v475
          %1136 = vrot.lane.b32.xlu0 %v1134, 112
          %v1137 = vpop.permute.xlu0 %1136
          %v1138 = vrot.slane %v1137, 1
          %v1139 = vsel %vm489, %v1137, %v1138
          %v1141 = vadd.f32 %v1129, %v1139
          %v1142 = vstv %s427
          %v1143 = vmul.f32 %v1142, %v479
          %1145 = vrot.lane.b32.xlu0 %v1143, 112
          %v1146 = vpop.permute.xlu0 %1145
          %v1147 = vrot.slane %v1146, 1
          %v1148 = vsel %vm489, %v1146, %v1147
          %v1150 = vadd.f32 %v1132, %v1148
          %v1151 = vstv %s385
          %v1152 = vmul.f32 %v1151, %v475
          %1154 = vrot.lane.b32.xlu0 %v1152, 96
          %v1155 = vpop.permute.xlu0 %1154
          %v1156 = vrot.slane %v1155, 1
          %v1157 = vsel %vm508, %v1155, %v1156
          %v1159 = vadd.f32 %v1141, %v1157
          %v1160 = vstv %s434
          %v1161 = vmul.f32 %v1160, %v479
          %1163 = vrot.lane.b32.xlu0 %v1161, 96
          %v1164 = vpop.permute.xlu0 %1163
          %v1165 = vrot.slane %v1164, 1
          %v1166 = vsel %vm508, %v1164, %v1165
          %v1168 = vadd.f32 %v1150, %v1166
          %v1169 = vstv %s392
          %v1170 = vmul.f32 %v1169, %v540
          %1172 = vrot.lane.b32.xlu0 %v1170, 80
          %v1173 = vpop.permute.xlu0 %1172
          %v1174 = vrot.slane %v1173, 7
          %v1175 = vsel %vm527, %v1174, %v1173
          %v1177 = vadd.f32 %v1159, %v1175
          %v1178 = vstv %s441
          %v1179 = vmul.f32 %v1178, %v551
          %1181 = vrot.lane.b32.xlu0 %v1179, 80
          %v1182 = vpop.permute.xlu0 %1181
          %v1183 = vrot.slane %v1182, 7
          %v1184 = vsel %vm527, %v1183, %v1182
          %v1186 = vadd.f32 %v1168, %v1184
          %v1187 = vstv %s399
          %v1188 = vmul.f32 %v1187, %v540
          %1190 = vrot.lane.b32.xlu0 %v1188, 64
          %v1191 = vpop.permute.xlu0 %1190
          %v1192 = vrot.slane %v1191, 7
          %v1193 = vsel %vm547, %v1192, %v1191
          %v1195 = vadd.f32 %v1177, %v1193
          %v1196 = vstv %s448
          %v1197 = vmul.f32 %v1196, %v551
          %1199 = vrot.lane.b32.xlu0 %v1197, 64
          %v1200 = vpop.permute.xlu0 %1199
          %v1201 = vrot.slane %v1200, 7
          %v1202 = vsel %vm547, %v1201, %v1200
          %v1204 = vadd.f32 %v1186, %v1202
          %v1205 = vstv %s406
          %v1206 = vmul.f32 %v1205, %v540
          %1208 = vrot.lane.b32.xlu0 %v1206, 48
          %v1209 = vpop.permute.xlu0 %1208
          %v1210 = vrot.slane %v1209, 7
          %v1211 = vsel %vm567, %v1210, %v1209
          %v1213 = vadd.f32 %v1195, %v1211
          %v1214 = vstv %s455
          %v1215 = vmul.f32 %v1214, %v551
          %1217 = vrot.lane.b32.xlu0 %v1215, 48
          %v1218 = vpop.permute.xlu0 %1217
          %v1219 = vrot.slane %v1218, 7
          %v1220 = vsel %vm567, %v1219, %v1218
          %v1222 = vadd.f32 %v1204, %v1220
          %v1223 = vstv %s413
          %v1224 = vmul.f32 %v1223, %v540
          %1226 = vrot.lane.b32.xlu0 %v1224, 32
          %v1227 = vpop.permute.xlu0 %1226
          %v1228 = vrot.slane %v1227, 7
          %v1229 = vsel %vm586, %v1228, %v1227
          %v1231 = vadd.f32 %v1213, %v1229
          %v1232 = vstv %s462
          %v1233 = vmul.f32 %v1232, %v551
          %1235 = vrot.lane.b32.xlu0 %v1233, 32
          %v1236 = vpop.permute.xlu0 %1235
          %v1237 = vrot.slane %v1236, 7
          %v1238 = vsel %vm586, %v1237, %v1236
          %v1240 = vadd.f32 %v1222, %v1238
          %v1241 = vadd.f32 %v1231, %v1240
          %1243 = vrot.lane.b32.xlu0 %v472, 82
          %v1244 = vpop.permute.xlu0 %1243
          %v1245 = vrot.slane %v1244, 7
          %vm1246 = vcmask 670720
          %v1247 = vsel %vm1246, %v1245, %v1244
          %v1249 = vmul.f32 %v1241, %v1247
          %1251 = vrot.lane.b32.xlu0 %v1249, 123
          %v1252 = vpop.permute.xlu0 %1251
          %v1253 = vrot.slane %v1252, 1
          %vm1254 = vcmask 1006592
          %v1255 = vsel %vm1254, %v1252, %v1253
          %v1257 = vadd.f32 %v1126, %v1255
          %v1258 = vstv %s372
          %v1259 = vmul.f32 %v1258, %v475
          %v1260 = vadd.f32 %v1259, 0.0
          %v1261 = vstv %s421
          %v1262 = vmul.f32 %v1261, %v479
          %v1263 = vadd.f32 %v1262, 0.0
          %v1264 = vstv %s379
          %v1265 = vmul.f32 %v1264, %v475
          %1267 = vrot.lane.b32.xlu0 %v1265, 112
          %v1268 = vpop.permute.xlu0 %1267
          %v1269 = vrot.slane %v1268, 1
          %v1270 = vsel %vm489, %v1268, %v1269
          %v1272 = vadd.f32 %v1260, %v1270
          %v1273 = vstv %s428
          %v1274 = vmul.f32 %v1273, %v479
          %1276 = vrot.lane.b32.xlu0 %v1274, 112
          %v1277 = vpop.permute.xlu0 %1276
          %v1278 = vrot.slane %v1277, 1
          %v1279 = vsel %vm489, %v1277, %v1278
          %v1281 = vadd.f32 %v1263, %v1279
          %v1282 = vstv %s386
          %v1283 = vmul.f32 %v1282, %v475
          %1285 = vrot.lane.b32.xlu0 %v1283, 96
          %v1286 = vpop.permute.xlu0 %1285
          %v1287 = vrot.slane %v1286, 1
          %v1288 = vsel %vm508, %v1286, %v1287
          %v1290 = vadd.f32 %v1272, %v1288
          %v1291 = vstv %s435
          %v1292 = vmul.f32 %v1291, %v479
          %1294 = vrot.lane.b32.xlu0 %v1292, 96
          %v1295 = vpop.permute.xlu0 %1294
          %v1296 = vrot.slane %v1295, 1
          %v1297 = vsel %vm508, %v1295, %v1296
          %v1299 = vadd.f32 %v1281, %v1297
          %v1300 = vstv %s393
          %v1301 = vmul.f32 %v1300, %v540
          %1303 = vrot.lane.b32.xlu0 %v1301, 80
          %v1304 = vpop.permute.xlu0 %1303
          %v1305 = vrot.slane %v1304, 7
          %v1306 = vsel %vm527, %v1305, %v1304
          %v1308 = vadd.f32 %v1290, %v1306
          %v1309 = vstv %s442
          %v1310 = vmul.f32 %v1309, %v551
          %1312 = vrot.lane.b32.xlu0 %v1310, 80
          %v1313 = vpop.permute.xlu0 %1312
          %v1314 = vrot.slane %v1313, 7
          %v1315 = vsel %vm527, %v1314, %v1313
          %v1317 = vadd.f32 %v1299, %v1315
          %v1318 = vstv %s400
          %v1319 = vmul.f32 %v1318, %v540
          %1321 = vrot.lane.b32.xlu0 %v1319, 64
          %v1322 = vpop.permute.xlu0 %1321
          %v1323 = vrot.slane %v1322, 7
          %v1324 = vsel %vm547, %v1323, %v1322
          %v1326 = vadd.f32 %v1308, %v1324
          %v1327 = vstv %s449
          %v1328 = vmul.f32 %v1327, %v551
          %1330 = vrot.lane.b32.xlu0 %v1328, 64
          %v1331 = vpop.permute.xlu0 %1330
          %v1332 = vrot.slane %v1331, 7
          %v1333 = vsel %vm547, %v1332, %v1331
          %v1335 = vadd.f32 %v1317, %v1333
          %v1336 = vstv %s407
          %v1337 = vmul.f32 %v1336, %v540
          %1339 = vrot.lane.b32.xlu0 %v1337, 48
          %v1340 = vpop.permute.xlu0 %1339
          %v1341 = vrot.slane %v1340, 7
          %v1342 = vsel %vm567, %v1341, %v1340
          %v1344 = vadd.f32 %v1326, %v1342
          %v1345 = vstv %s456
          %v1346 = vmul.f32 %v1345, %v551
          %1348 = vrot.lane.b32.xlu0 %v1346, 48
          %v1349 = vpop.permute.xlu0 %1348
          %v1350 = vrot.slane %v1349, 7
          %v1351 = vsel %vm567, %v1350, %v1349
          %v1353 = vadd.f32 %v1335, %v1351
          %v1354 = vstv %s414
          %v1355 = vmul.f32 %v1354, %v540
          %1357 = vrot.lane.b32.xlu0 %v1355, 32
          %v1358 = vpop.permute.xlu0 %1357
          %v1359 = vrot.slane %v1358, 7
          %v1360 = vsel %vm586, %v1359, %v1358
          %v1362 = vadd.f32 %v1344, %v1360
          %v1363 = vstv %s463
          %v1364 = vmul.f32 %v1363, %v551
          %1366 = vrot.lane.b32.xlu0 %v1364, 32
          %v1367 = vpop.permute.xlu0 %1366
          %v1368 = vrot.slane %v1367, 7
          %v1369 = vsel %vm586, %v1368, %v1367
          %v1371 = vadd.f32 %v1353, %v1369
          %v1372 = vadd.f32 %v1362, %v1371
          %1374 = vrot.lane.b32.xlu0 %v474, 83
          %v1375 = vpop.permute.xlu0 %1374
          %v1376 = vrot.slane %v1375, 7
          %vm1377 = vcmask 678912
          %v1378 = vsel %vm1377, %v1376, %v1375
          %v1380 = vmul.f32 %v1372, %v1378
          %1382 = vrot.lane.b32.xlu0 %v1380, 122
          %v1383 = vpop.permute.xlu0 %1382
          %v1384 = vrot.slane %v1383, 1
          %vm1385 = vcmask 998400
          %v1386 = vsel %vm1385, %v1383, %v1384
          %v1388 = vadd.f32 %v1257, %v1386
          %v1389 = vxor.u32 %v1388, 2147483648
          %v1390 = vmul.f32 %v1389, 1.442695
          %v1391 = vpow.pop %v1390
          %v1392 = vadd.f32 %v1391, 1.0
          %v1393 = vrcp.pop %v1392
          %v1394 = vmul.f32 1.0, %v1393
          %1396 = vrot.lane.b32.xlu0 %v1394, 51
          %v1397 = vpop.permute.xlu0 %1396
          %v1398 = vrot.slane %v1397, 1
          %vm1399 = vcmask 416768
          %v1400 = vsel %vm1399, %v1397, %v1398
          %v1402 = vlaneseq
          %vm1403 = vcmp.ge.s32.totalorder %v1402, 0
          %vm1404 = vcmp.lt.s32.totalorder %v1402, 256
          %vm1405 = vmand %vm1403, %vm1404
          %1406 = vst.msk [vmem:[%s227] sm:$0x3] %vm1405, %v1400
        $region56: #{tpu_custom_call.1} parent=31 // pred_fallthru
          _
        %s1407 = sand.u32 %s112, 1
        %s1408 = scalar_lea.sflag [#allocation6], %s1407
        %s1409 = sand.u32 %s112, 1
        %s1410 = smul.addr %s1409, 2
        %s1411 = scalar_lea.vmem [#allocation11], %s1410
        // Predicated region
        $region57: #{tpu_custom_call.1} parent=31 // pred_check
          %p1412 = pneg %p122
        $region58: #{tpu_custom_call.1} parent=31 // pred_check_branch
          %1414 = sbr.rel (%p1412) target = $region60
        $region59: #{tpu_custom_call.1} parent=31 // pred_region
          %s1416 = ssub.s32 32, 32
          %1417 = vsyncadd %s1408, %s1416
          %s1418 = smul.addr %s26, 2
          %s1419 = smul.addr %s1418, 16
          %s1420 = scalar_lea.hbm %s3, %s1419
          %s1422 = sshll.u32 %s1411, 4
          %s1423 = int_to_ptr.vmem [resolvable:$true] %s1422
          %1425 = dma.vmem_to_hbm [thread:$0]  %s1423, 32, %s1420, %s1408
        $region60: #{tpu_custom_call.1} parent=31 // pred_fallthru
          _
      $region32: #{tpu_custom_call.1} parent=5 // pred_fallthru
        _
      %p1426 = scmp.le.s32.totalorder 2, %s17
      // Predicated region
      $region61: #{tpu_custom_call.1} parent=5 // pred_check
        %p1427 = pneg %p1426
      $region62: #{tpu_custom_call.1} parent=5 // pred_check_branch
        %1429 = sbr.rel (%p1427) target = $region64
      $region63: #{tpu_custom_call.1} parent=5 // pred_region
        %s1430 = ssub.s32 %s17, 2
        // Predicated region
        $region65: #{tpu_custom_call.1} parent=63 // pred_check
          %p1431 = pneg %p128
        $region66: #{tpu_custom_call.1} parent=63 // pred_check_branch
          %1433 = sbr.rel (%p1431) target = $region68
        $region67: #{tpu_custom_call.1} parent=63 // pred_region
          %s1434 = sand.u32 %s113, 1
          %s1435 = scalar_lea.sflag [#allocation6], %s1434
          %s1436 = sand.u32 %s113, 1
          %s1437 = smul.addr %s1436, 2
          %s1438 = scalar_lea.vmem [#allocation11], %s1437
          %1439 = dma.done %s1435, 32
        $region68: #{tpu_custom_call.1} parent=63 // pred_fallthru
          _
      $region64: #{tpu_custom_call.1} parent=5 // pred_fallthru
        _
    $region6: #{tpu_custom_call.1} parent=1 // loop_footer
      %s21 = sadd.s32 1, %s17
    $region7: #{tpu_custom_call.1} parent=1 // loop_footer_branch
      %16 = sbr.rel target = $region3
    $region8: #{tpu_custom_call.1} parent=1 // loop_exit
      _
    %1440 = vsyncpa [#allocation5], 1
    %s1441 = scalar_lea.sflag [#allocation5], 1
    %1442 = vsyncpa %s1441, 1
    %1443 = vsyncpa [#allocation10], 1
    %s1444 = scalar_lea.sflag [#allocation10], 1
    %1445 = vsyncpa %s1444, 1
    %1446 = vsyncpa [#allocation6], 1
    %s1447 = scalar_lea.sflag [#allocation6], 1
    %1448 = vsyncpa %s1447, 1
    %1449 = vsyncpa [#allocation7], 1
    %s1450 = scalar_lea.sflag [#allocation7], 1
    %1451 = vsyncpa %s1450, 1

</llo_original>
